<compile_context>
chip_gen: v7x
topology: tpu7x:2x2x1
jax: 0.10.0
libtpu: 0.0.40
codegen_flags: <defaults>
</compile_context>

<pallas_src>
import functools

import jax
import jax.numpy as jnp
from jax.experimental import pallas as pl
from jax.experimental.pallas import tpu as pltpu


def _focal_kernel(pred_ref, tgt_ref, w_ref, *out_refs, gamma, alpha,
                  n_rows, tile_rows, need_count, has_tail):
    loss_ref = out_refs[0]
    cnt_ref = out_refs[1] if need_count else None
    i = pl.program_id(0)

    def body(masked):
        x = pred_ref[...].astype(jnp.float32)
        t = tgt_ref[...].astype(jnp.float32)
        w = w_ref[...].astype(jnp.float32)

        if masked:
            # Rows at/after n_rows in this block are stale VMEM from the clipped
            # edge DMA; zero x/t/w there BEFORE any math so garbage can't
            # produce NaN/Inf, and so the (w > 0) count stays exact.
            row = jax.lax.broadcasted_iota(jnp.int32, x.shape, 0) + i * tile_rows
            valid = row < n_rows
            zero = jnp.zeros_like(x)
            x = jnp.where(valid, x, zero)
            t = jnp.where(valid, t, zero)
            w = jnp.where(valid, w, zero)

        # One shared exp(-|x|) feeds both sigmoid(x) and the stable BCE.
        e = jnp.exp(-jnp.abs(x))                          # EUP: exp
        inv = 1.0 / (1.0 + e)                             # EUP: reciprocal
        p = jnp.where(x >= 0.0, inv, e * inv)             # == sigmoid(x)
        bce = jnp.maximum(x, 0.0) - x * t + jnp.log1p(e)  # EUP: log1p

        pt = p + t * (1.0 - 2.0 * p)                      # == (1-p)*t + p*(1-t)
        fw = ((2.0 * alpha - 1.0) * t + (1.0 - alpha)) * w

        g = float(gamma)
        if g == 2.0:                    # default focal gamma: avoid pow (= exp+log)
            fw = fw * (pt * pt)
        elif g == 0.0:
            pass
        elif g.is_integer() and 0.0 < g <= 4.0:
            pw = pt
            for _ in range(int(g) - 1):
                pw = pw * pt
            fw = fw * pw
        else:
            fw = fw * (pt ** g)

        # Per-block partial sums (cross-lane reduce rides the XLU slot).
        loss_ref[0, 0] = jnp.sum(bce * fw)
        if need_count:
            cnt_ref[0, 0] = jnp.sum((w > 0.0).astype(jnp.float32))

    if has_tail:
        is_tail = i == pl.num_programs(0) - 1

        @pl.when(is_tail)
        def _():
            body(True)

        @pl.when(jnp.logical_not(is_tail))
        def _():
            body(False)
    else:
        body(False)


def weighted_sigmoid_focal_loss(cls_score, label, label_weight, *,
                                gamma=2.0, alpha=0.25, loss_weight=1.0,
                                avg_factor=None, num_classes=80,
                                block_rows=None):
    """Pallas TPU implementation of FocalLoss.forward (use_sigmoid=True).

    The three input streams are read in-place (no pad / cast / relayout passes);
    dtype conversion happens on the VMEM blocks inside the kernel, and the
    ragged last row-block is masked in-kernel.
    """
    C = cls_score.shape[-1]
    x = cls_score.reshape(-1, C)        # merge leading dims (no-op for 2-D inputs)
    t = label.reshape(-1, C)            # dtypes left as supplied; cast in-kernel
    w = label_weight.reshape(-1, C)
    N = x.shape[0]

    # Block = (tile_rows, C) full-width rows -> one contiguous HBM chunk per DMA.
    # Size for ~2 MiB per f32 input block (3 inputs x 2 pipeline buffers ~= 12 MiB).
    lane_c = ((C + 127) // 128) * 128                  # lanes one VMEM row occupies
    if block_rows is None:
        tile_rows = (2 * 1024 * 1024) // (lane_c * 4)
    else:
        tile_rows = int(block_rows)
    tile_rows = min(tile_rows, ((N + 15) // 16) * 16)
    tile_rows = max(16, (tile_rows // 16) * 16)        # sublane-friendly multiple

    num_blocks = (N + tile_rows - 1) // tile_rows
    has_tail = (N % tile_rows) != 0
    need_count = avg_factor is None                    # skip count path if unused

    kernel = functools.partial(
        _focal_kernel, gamma=float(gamma), alpha=float(alpha),
        n_rows=N, tile_rows=tile_rows, need_count=need_count, has_tail=has_tail)

    in_spec = pl.BlockSpec((tile_rows, C), lambda i: (i, 0))
    scalar_out_spec = pl.BlockSpec((1, 1), lambda i: (i, 0),
                                   memory_space=pltpu.MemorySpace.SMEM)

    out_shape = [jax.ShapeDtypeStruct((num_blocks, 1), jnp.float32)]
    out_specs = [scalar_out_spec]
    if need_count:
        out_shape.append(jax.ShapeDtypeStruct((num_blocks, 1), jnp.float32))
        out_specs.append(scalar_out_spec)

    outs = pl.pallas_call(
        kernel,
        grid=(num_blocks,),
        in_specs=[in_spec, in_spec, in_spec],
        out_specs=tuple(out_specs),
        out_shape=tuple(out_shape),
        compiler_params=pltpu.CompilerParams(
            dimension_semantics=("parallel",),         # megacore-splittable on v7x
            vmem_limit_bytes=32 * 1024 * 1024,         # safe on v5e/v6e/v7x
        ),
    )(x, t, w)

    loss_sum = jnp.sum(outs[0])
    if need_count:
        avg_factor = jnp.sum(outs[1]) / num_classes + 1e-6
    # matches torch: loss_weight * sum(...)[None] / avg_factor  -> shape (1,)
    return (loss_weight * loss_sum / avg_factor)[None]


class FocalLoss:
    """Mirror of the PyTorch module (sigmoid-only). No learnable parameters."""

    def __init__(self, use_sigmoid=True, loss_weight=1.0, gamma=2.0, alpha=0.25):
        assert use_sigmoid is True, 'Only sigmoid focaloss supported now.'
        self.use_sigmoid = use_sigmoid
        self.loss_weight = loss_weight
        self.gamma = gamma
        self.alpha = alpha

    def __call__(self, cls_score, label, label_weight, *args,
                 avg_factor=None, num_classes=80, **kwargs):
        return weighted_sigmoid_focal_loss(
            cls_score, label, label_weight,
            gamma=self.gamma, alpha=self.alpha, loss_weight=self.loss_weight,
            avg_factor=avg_factor, num_classes=num_classes)


def _reference(cls_score, label, label_weight, gamma, alpha, loss_weight,
               num_classes, avg_factor=None):
    x = cls_score.astype(jnp.float32)
    t = label.astype(jnp.float32)
    w = label_weight.astype(jnp.float32)
    p = jax.nn.sigmoid(x)
    pt = (1 - p) * t + p * (1 - t)
    fw = (alpha * t + (1 - alpha) * (1 - t)) * w * pt ** gamma
    bce = jnp.maximum(x, 0.0) - x * t + jnp.log1p(jnp.exp(-jnp.abs(x)))
    loss_sum = jnp.sum(bce * fw)
    if avg_factor is None:
        avg_factor = jnp.sum(w > 0) / num_classes + 1e-6
    return (loss_weight * loss_sum / avg_factor)[None]


if __name__ == "__main__":
    key = jax.random.PRNGKey(0)
    keys = jax.random.split(key, 9)

    loss_mod = FocalLoss(use_sigmoid=True, loss_weight=1.0, gamma=2.0, alpha=0.25)

    # Case 1: (512, 8) — single full block, no tail, count path (avg_factor=None).
    N, C = 512, 8
    cls_score = jax.random.normal(keys[0], (N, C), dtype=jnp.float32)
    label = (jax.random.uniform(keys[1], (N, C)) < 0.1).astype(jnp.float32)
    label_weight = (jax.random.uniform(keys[2], (N, C)) < 0.9).astype(jnp.float32)
    out1 = jax.block_until_ready(loss_mod(cls_score, label, label_weight, num_classes=C))
    ref1 = _reference(cls_score, label, label_weight, 2.0, 0.25, 1.0, C)
    assert out1.shape == (1,)
    assert jnp.allclose(out1, ref1, rtol=1e-4, atol=1e-6), (out1, ref1)

    # Case 2: (300, 20) — ragged block (in-kernel tail mask) + explicit avg_factor
    # (compiles the no-count kernel variant).
    N2, C2 = 300, 20
    cls_score2 = jax.random.normal(keys[3], (N2, C2), dtype=jnp.float32) * 2.0
    label2 = (jax.random.uniform(keys[4], (N2, C2)) < 0.05).astype(jnp.float32)
    label_weight2 = (jax.random.uniform(keys[5], (N2, C2)) < 0.8).astype(jnp.float32)
    out2 = jax.block_until_ready(
        loss_mod(cls_score2, label2, label_weight2, avg_factor=123.0, num_classes=C2))
    ref2 = _reference(cls_score2, label2, label_weight2, 2.0, 0.25, 1.0, C2,
                      avg_factor=123.0)
    assert out2.shape == (1,)
    assert jnp.allclose(out2, ref2, rtol=1e-4, atol=1e-6), (out2, ref2)

    # Case 3: (1000, 16) with a small forced block — multi-block grid + masked
    # tail + count path.
    N3, C3 = 1000, 16
    cls_score3 = jax.random.normal(keys[6], (N3, C3), dtype=jnp.float32)
    label3 = (jax.random.uniform(keys[7], (N3, C3)) < 0.1).astype(jnp.float32)
    label_weight3 = (jax.random.uniform(keys[8], (N3, C3)) < 0.7).astype(jnp.float32)
    out3 = jax.block_until_ready(weighted_sigmoid_focal_loss(
        cls_score3, label3, label_weight3, gamma=2.0, alpha=0.25, loss_weight=1.0,
        num_classes=C3, block_rows=128))
    ref3 = _reference(cls_score3, label3, label_weight3, 2.0, 0.25, 1.0, C3)
    assert out3.shape == (1,)
    assert jnp.allclose(out3, ref3, rtol=1e-4, atol=1e-6), (out3, ref3)

    print("KERNEL_OK")
</pallas_src>

<mosaic_0001>
module attributes {stable_mosaic.version = 11 : i64} {
  func.func @_focal_kernel(%arg0: i32, %arg1: memref<512x8xf32, #tpu.memory_space<vmem>>, %arg2: memref<512x8xf32, #tpu.memory_space<vmem>>, %arg3: memref<512x8xf32, #tpu.memory_space<vmem>>, %arg4: memref<1x1xf32, #tpu.memory_space<smem>>, %arg5: memref<1x1xf32, #tpu.memory_space<smem>>) attributes {dimension_semantics = [#tpu.dimension_semantics<parallel>], iteration_bounds = array<i64: 1>, scalar_prefetch = 0 : i64, scratch_operands = 0 : i64, tpu.core_type = #tpu.core_type<tc>, window_params = [{transform_indices = @transform_0, window_bounds = array<i64: 512, 8>}, {transform_indices = @transform_1, window_bounds = array<i64: 512, 8>}, {transform_indices = @transform_2, window_bounds = array<i64: 512, 8>}, {transform_indices = @transform_3, window_bounds = array<i64: 1, 1>}, {transform_indices = @transform_4, window_bounds = array<i64: 1, 1>}]} {
    %c0 = arith.constant 0 : index
    %c0_0 = arith.constant 0 : index
    %0 = vector.load %arg1[%c0, %c0_0] : memref<512x8xf32, #tpu.memory_space<vmem>>, vector<512x8xf32>
    %c0_1 = arith.constant 0 : index
    %c0_2 = arith.constant 0 : index
    %1 = vector.load %arg2[%c0_1, %c0_2] : memref<512x8xf32, #tpu.memory_space<vmem>>, vector<512x8xf32>
    %c0_3 = arith.constant 0 : index
    %c0_4 = arith.constant 0 : index
    %2 = vector.load %arg3[%c0_3, %c0_4] : memref<512x8xf32, #tpu.memory_space<vmem>>, vector<512x8xf32>
    %3 = math.absf %0 : vector<512x8xf32>
    %cst = arith.constant 0.000000e+00 : f32
    %4 = vector.broadcast %cst : f32 to vector<512x8xf32>
    %5 = arith.subf %4, %3 : vector<512x8xf32>
    %6 = math.exp %5 : vector<512x8xf32>
    %cst_5 = arith.constant 1.000000e+00 : f32
    %7 = vector.broadcast %cst_5 : f32 to vector<512x8xf32>
    %8 = arith.addf %7, %6 : vector<512x8xf32>
    %cst_6 = arith.constant 1.000000e+00 : f32
    %9 = vector.broadcast %cst_6 : f32 to vector<512x8xf32>
    %10 = arith.divf %9, %8 : vector<512x8xf32>
    %cst_7 = arith.constant 0.000000e+00 : f32
    %11 = vector.broadcast %cst_7 : f32 to vector<512x8xf32>
    %12 = arith.cmpf oge, %0, %11 : vector<512x8xf32>
    %13 = arith.mulf %6, %10 : vector<512x8xf32>
    %14 = arith.select %12, %10, %13 : vector<512x8xi1>, vector<512x8xf32>
    %cst_8 = arith.constant 0.000000e+00 : f32
    %15 = vector.broadcast %cst_8 : f32 to vector<512x8xf32>
    %16 = arith.maximumf %0, %15 : vector<512x8xf32>
    %17 = arith.mulf %0, %1 : vector<512x8xf32>
    %18 = arith.subf %16, %17 : vector<512x8xf32>
    %19 = math.log1p %6 : vector<512x8xf32>
    %20 = arith.addf %18, %19 : vector<512x8xf32>
    %cst_9 = arith.constant 2.000000e+00 : f32
    %21 = vector.broadcast %cst_9 : f32 to vector<512x8xf32>
    %22 = arith.mulf %21, %14 : vector<512x8xf32>
    %cst_10 = arith.constant 1.000000e+00 : f32
    %23 = vector.broadcast %cst_10 : f32 to vector<512x8xf32>
    %24 = arith.subf %23, %22 : vector<512x8xf32>
    %25 = arith.mulf %1, %24 : vector<512x8xf32>
    %26 = arith.addf %14, %25 : vector<512x8xf32>
    %cst_11 = arith.constant -5.000000e-01 : f32
    %27 = vector.broadcast %cst_11 : f32 to vector<512x8xf32>
    %28 = arith.mulf %27, %1 : vector<512x8xf32>
    %cst_12 = arith.constant 7.500000e-01 : f32
    %29 = vector.broadcast %cst_12 : f32 to vector<512x8xf32>
    %30 = arith.addf %28, %29 : vector<512x8xf32>
    %31 = arith.mulf %30, %2 : vector<512x8xf32>
    %32 = arith.mulf %26, %26 : vector<512x8xf32>
    %33 = arith.mulf %31, %32 : vector<512x8xf32>
    %34 = arith.mulf %20, %33 : vector<512x8xf32>
    %35 = vector.shape_cast %34 : vector<512x8xf32> to vector<1x512x8xf32>
    %cst_13 = arith.constant dense<0.000000e+00> : vector<1xf32>
    %36 = vector.multi_reduction <add>, %35, %cst_13 [1, 2] : vector<1x512x8xf32> to vector<1xf32>
    %37 = vector.shape_cast %36 : vector<1xf32> to vector<1x1x1xf32>
    %38 = vector.extract %37[0, 0, 0] : f32 from vector<1x1x1xf32>
    %c0_14 = arith.constant 0 : index
    %c0_15 = arith.constant 0 : index
    %39 = memref.load %arg4[%c0_14, %c0_15] : memref<1x1xf32, #tpu.memory_space<smem>>
    memref.store %38, %arg4[%c0_14, %c0_15] : memref<1x1xf32, #tpu.memory_space<smem>>
    %cst_16 = arith.constant 0.000000e+00 : f32
    %40 = vector.broadcast %cst_16 : f32 to vector<512x8xf32>
    %41 = arith.cmpf ogt, %2, %40 : vector<512x8xf32>
    %42 = arith.extui %41 : vector<512x8xi1> to vector<512x8xi32>
    %43 = arith.sitofp %42 : vector<512x8xi32> to vector<512x8xf32>
    %44 = vector.shape_cast %43 : vector<512x8xf32> to vector<1x512x8xf32>
    %cst_17 = arith.constant dense<0.000000e+00> : vector<1xf32>
    %45 = vector.multi_reduction <add>, %44, %cst_17 [1, 2] : vector<1x512x8xf32> to vector<1xf32>
    %46 = vector.shape_cast %45 : vector<1xf32> to vector<1x1x1xf32>
    %47 = vector.extract %46[0, 0, 0] : f32 from vector<1x1x1xf32>
    %c0_18 = arith.constant 0 : index
    %c0_19 = arith.constant 0 : index
    %48 = memref.load %arg5[%c0_18, %c0_19] : memref<1x1xf32, #tpu.memory_space<smem>>
    memref.store %47, %arg5[%c0_18, %c0_19] : memref<1x1xf32, #tpu.memory_space<smem>>
    return
  }
  func.func @transform_0(%arg0: i32) -> (i32, i32) {
    %c0_i32 = arith.constant 0 : i32
    %c0_i32_0 = arith.constant 0 : i32
    return %arg0, %c0_i32 : i32, i32
  }
  func.func @transform_1(%arg0: i32) -> (i32, i32) {
    %c0_i32 = arith.constant 0 : i32
    %c0_i32_0 = arith.constant 0 : i32
    return %arg0, %c0_i32 : i32, i32
  }
  func.func @transform_2(%arg0: i32) -> (i32, i32) {
    %c0_i32 = arith.constant 0 : i32
    %c0_i32_0 = arith.constant 0 : i32
    return %arg0, %c0_i32 : i32, i32
  }
  func.func @transform_3(%arg0: i32) -> (i32, i32) {
    %c0_i32 = arith.constant 0 : i32
    %c0_i32_0 = arith.constant 0 : i32
    return %arg0, %c0_i32 : i32, i32
  }
  func.func @transform_4(%arg0: i32) -> (i32, i32) {
    %c0_i32 = arith.constant 0 : i32
    %c0_i32_0 = arith.constant 0 : i32
    return %arg0, %c0_i32 : i32, i32
  }
}

</mosaic_0001>

<llo_original>
// kernel: tpu_custom_call.1
$region0: #{tpu_custom_call.1}
  #allocation0 [shape = 'u32[]', space=smem, size = 0x4, offset = 0x4, fixed_abs, tag = 'smem constant byte address 0x4 - core index']
  #allocation1 [shape = 'u32[144,128]{1,0:T(1,128)}', space=vmem, size = 0x12000, scoped, tag = 'internal scratch']
  %s0 = inlined_call_operand.vmem [shape: f32[512,8], index: 0, kind: input, shape index: {}]
  %s1 = inlined_call_operand.vmem [shape: f32[512,8], index: 1, kind: input, shape index: {}]
  %s2 = inlined_call_operand.vmem [shape: f32[512,8], index: 2, kind: input, shape index: {}]
  %s3 = inlined_call_operand.hbm [shape: f32[1,1], index: 3, kind: output, shape index: {0}]
  %s4 = inlined_call_operand.hbm [shape: f32[1,1], index: 4, kind: output, shape index: {1}]
  %5 = xla_tuple %s3, %s4
  %s6 = sld [smem:[#allocation0]]
  $region30: #{tpu_custom_call.1} parent=0
    _
  %s8 = ssub.s32 1, %s6
  %s9 = scalar_select 0, %s8, %s6
  $region1: #{tpu_custom_call.1} parent=0
    #allocation2 [shape = 'u8[512]{0}', space=smem, size = 0x200, scoped, tag = 'output window, operand 0, single buffered']
    #allocation3 [shape = 's32[1]{0}', space=sflag, size = 0x4, scoped, tag = 'scoped memory for tpu_custom_call.1']
    #allocation4 [shape = 'u8[512]{0}', space=smem, size = 0x200, scoped, tag = 'output window, operand 1, single buffered']
    #allocation5 [shape = 's32[1]{0}', space=sflag, size = 0x4, scoped, tag = 'scoped memory for tpu_custom_call.1']
    %10 = vsyncpa [#allocation3], 0
    %11 = vsyncpa [#allocation5], 0
    // Predicated region
    $region2: #{tpu_custom_call.1} parent=1 // pred_check
      _
    $region3: #{tpu_custom_call.1} parent=1 // pred_check_branch
      %13 = sbr.rel (0) target = $region5
    $region4: #{tpu_custom_call.1} parent=1 // pred_region
      _
    $region5: #{tpu_custom_call.1} parent=1 // pred_fallthru
      _
    // Predicated region
    $region6: #{tpu_custom_call.1} parent=1 // pred_check
      _
    $region7: #{tpu_custom_call.1} parent=1 // pred_check_branch
      %15 = sbr.rel (0) target = $region9
    $region8: #{tpu_custom_call.1} parent=1 // pred_region
      _
    $region9: #{tpu_custom_call.1} parent=1 // pred_fallthru
      _
    // Predicated region
    $region10: #{tpu_custom_call.1} parent=1 // pred_check
      _
    $region11: #{tpu_custom_call.1} parent=1 // pred_check_branch
      %17 = sbr.rel (0) target = $region13
    $region12: #{tpu_custom_call.1} parent=1 // pred_region
      _
    $region13: #{tpu_custom_call.1} parent=1 // pred_fallthru
      _
    %v18 = vld [vmem:[%s0] sm:$0xff]
    %v19 = vld [vmem:[%s0 + $0x8] sm:$0xff]
    %v20 = vld [vmem:[%s0 + $0x10] sm:$0xff]
    %v21 = vld [vmem:[%s0 + $0x18] sm:$0xff]
    %v22 = vld [vmem:[%s0 + $0x20] sm:$0xff]
    %v23 = vld [vmem:[%s0 + $0x28] sm:$0xff]
    %v24 = vld [vmem:[%s0 + $0x30] sm:$0xff]
    %v25 = vld [vmem:[%s0 + $0x38] sm:$0xff]
    %v26 = vld [vmem:[%s0 + $0x40] sm:$0xff]
    %v27 = vld [vmem:[%s0 + $0x48] sm:$0xff]
    %v28 = vld [vmem:[%s0 + $0x50] sm:$0xff]
    %v29 = vld [vmem:[%s0 + $0x58] sm:$0xff]
    %v30 = vld [vmem:[%s0 + $0x60] sm:$0xff]
    %v31 = vld [vmem:[%s0 + $0x68] sm:$0xff]
    %v32 = vld [vmem:[%s0 + $0x70] sm:$0xff]
    %v33 = vld [vmem:[%s0 + $0x78] sm:$0xff]
    %v34 = vld [vmem:[%s0 + $0x80] sm:$0xff]
    %v35 = vld [vmem:[%s0 + $0x88] sm:$0xff]
    %v36 = vld [vmem:[%s0 + $0x90] sm:$0xff]
    %v37 = vld [vmem:[%s0 + $0x98] sm:$0xff]
    %v38 = vld [vmem:[%s0 + $0xa0] sm:$0xff]
    %v39 = vld [vmem:[%s0 + $0xa8] sm:$0xff]
    %v40 = vld [vmem:[%s0 + $0xb0] sm:$0xff]
    %v41 = vld [vmem:[%s0 + $0xb8] sm:$0xff]
    %v42 = vld [vmem:[%s0 + $0xc0] sm:$0xff]
    %v43 = vld [vmem:[%s0 + $0xc8] sm:$0xff]
    %v44 = vld [vmem:[%s0 + $0xd0] sm:$0xff]
    %v45 = vld [vmem:[%s0 + $0xd8] sm:$0xff]
    %v46 = vld [vmem:[%s0 + $0xe0] sm:$0xff]
    %v47 = vld [vmem:[%s0 + $0xe8] sm:$0xff]
    %v48 = vld [vmem:[%s0 + $0xf0] sm:$0xff]
    %v49 = vld [vmem:[%s0 + $0xf8] sm:$0xff]
    %v50 = vld [vmem:[%s0 + $0x100] sm:$0xff]
    %v51 = vld [vmem:[%s0 + $0x108] sm:$0xff]
    %v52 = vld [vmem:[%s0 + $0x110] sm:$0xff]
    %v53 = vld [vmem:[%s0 + $0x118] sm:$0xff]
    %v54 = vld [vmem:[%s0 + $0x120] sm:$0xff]
    %v55 = vld [vmem:[%s0 + $0x128] sm:$0xff]
    %v56 = vld [vmem:[%s0 + $0x130] sm:$0xff]
    %v57 = vld [vmem:[%s0 + $0x138] sm:$0xff]
    %v58 = vld [vmem:[%s0 + $0x140] sm:$0xff]
    %v59 = vld [vmem:[%s0 + $0x148] sm:$0xff]
    %v60 = vld [vmem:[%s0 + $0x150] sm:$0xff]
    %v61 = vld [vmem:[%s0 + $0x158] sm:$0xff]
    %v62 = vld [vmem:[%s0 + $0x160] sm:$0xff]
    %v63 = vld [vmem:[%s0 + $0x168] sm:$0xff]
    %v64 = vld [vmem:[%s0 + $0x170] sm:$0xff]
    %v65 = vld [vmem:[%s0 + $0x178] sm:$0xff]
    %v66 = vld [vmem:[%s0 + $0x180] sm:$0xff]
    %v67 = vld [vmem:[%s0 + $0x188] sm:$0xff]
    %v68 = vld [vmem:[%s0 + $0x190] sm:$0xff]
    %v69 = vld [vmem:[%s0 + $0x198] sm:$0xff]
    %v70 = vld [vmem:[%s0 + $0x1a0] sm:$0xff]
    %v71 = vld [vmem:[%s0 + $0x1a8] sm:$0xff]
    %v72 = vld [vmem:[%s0 + $0x1b0] sm:$0xff]
    %v73 = vld [vmem:[%s0 + $0x1b8] sm:$0xff]
    %v74 = vld [vmem:[%s0 + $0x1c0] sm:$0xff]
    %v75 = vld [vmem:[%s0 + $0x1c8] sm:$0xff]
    %v76 = vld [vmem:[%s0 + $0x1d0] sm:$0xff]
    %v77 = vld [vmem:[%s0 + $0x1d8] sm:$0xff]
    %v78 = vld [vmem:[%s0 + $0x1e0] sm:$0xff]
    %v79 = vld [vmem:[%s0 + $0x1e8] sm:$0xff]
    %v80 = vld [vmem:[%s0 + $0x1f0] sm:$0xff]
    %v81 = vld [vmem:[%s0 + $0x1f8] sm:$0xff]
    %v82 = vld [vmem:[%s1] sm:$0xff]
    %v83 = vld [vmem:[%s1 + $0x8] sm:$0xff]
    %v84 = vld [vmem:[%s1 + $0x10] sm:$0xff]
    %v85 = vld [vmem:[%s1 + $0x18] sm:$0xff]
    %v86 = vld [vmem:[%s1 + $0x20] sm:$0xff]
    %v87 = vld [vmem:[%s1 + $0x28] sm:$0xff]
    %v88 = vld [vmem:[%s1 + $0x30] sm:$0xff]
    %v89 = vld [vmem:[%s1 + $0x38] sm:$0xff]
    %v90 = vld [vmem:[%s1 + $0x40] sm:$0xff]
    %v91 = vld [vmem:[%s1 + $0x48] sm:$0xff]
    %v92 = vld [vmem:[%s1 + $0x50] sm:$0xff]
    %v93 = vld [vmem:[%s1 + $0x58] sm:$0xff]
    %v94 = vld [vmem:[%s1 + $0x60] sm:$0xff]
    %v95 = vld [vmem:[%s1 + $0x68] sm:$0xff]
    %v96 = vld [vmem:[%s1 + $0x70] sm:$0xff]
    %v97 = vld [vmem:[%s1 + $0x78] sm:$0xff]
    %v98 = vld [vmem:[%s1 + $0x80] sm:$0xff]
    %v99 = vld [vmem:[%s1 + $0x88] sm:$0xff]
    %v100 = vld [vmem:[%s1 + $0x90] sm:$0xff]
    %v101 = vld [vmem:[%s1 + $0x98] sm:$0xff]
    %v102 = vld [vmem:[%s1 + $0xa0] sm:$0xff]
    %v103 = vld [vmem:[%s1 + $0xa8] sm:$0xff]
    %v104 = vld [vmem:[%s1 + $0xb0] sm:$0xff]
    %v105 = vld [vmem:[%s1 + $0xb8] sm:$0xff]
    %v106 = vld [vmem:[%s1 + $0xc0] sm:$0xff]
    %v107 = vld [vmem:[%s1 + $0xc8] sm:$0xff]
    %v108 = vld [vmem:[%s1 + $0xd0] sm:$0xff]
    %v109 = vld [vmem:[%s1 + $0xd8] sm:$0xff]
    %v110 = vld [vmem:[%s1 + $0xe0] sm:$0xff]
    %v111 = vld [vmem:[%s1 + $0xe8] sm:$0xff]
    %v112 = vld [vmem:[%s1 + $0xf0] sm:$0xff]
    %v113 = vld [vmem:[%s1 + $0xf8] sm:$0xff]
    %v114 = vld [vmem:[%s1 + $0x100] sm:$0xff]
    %v115 = vld [vmem:[%s1 + $0x108] sm:$0xff]
    %v116 = vld [vmem:[%s1 + $0x110] sm:$0xff]
    %v117 = vld [vmem:[%s1 + $0x118] sm:$0xff]
    %v118 = vld [vmem:[%s1 + $0x120] sm:$0xff]
    %v119 = vld [vmem:[%s1 + $0x128] sm:$0xff]
    %v120 = vld [vmem:[%s1 + $0x130] sm:$0xff]
    %v121 = vld [vmem:[%s1 + $0x138] sm:$0xff]
    %v122 = vld [vmem:[%s1 + $0x140] sm:$0xff]
    %v123 = vld [vmem:[%s1 + $0x148] sm:$0xff]
    %v124 = vld [vmem:[%s1 + $0x150] sm:$0xff]
    %v125 = vld [vmem:[%s1 + $0x158] sm:$0xff]
    %v126 = vld [vmem:[%s1 + $0x160] sm:$0xff]
    %v127 = vld [vmem:[%s1 + $0x168] sm:$0xff]
    %v128 = vld [vmem:[%s1 + $0x170] sm:$0xff]
    %v129 = vld [vmem:[%s1 + $0x178] sm:$0xff]
    %v130 = vld [vmem:[%s1 + $0x180] sm:$0xff]
    %v131 = vld [vmem:[%s1 + $0x188] sm:$0xff]
    %v132 = vld [vmem:[%s1 + $0x190] sm:$0xff]
    %v133 = vld [vmem:[%s1 + $0x198] sm:$0xff]
    %v134 = vld [vmem:[%s1 + $0x1a0] sm:$0xff]
    %v135 = vld [vmem:[%s1 + $0x1a8] sm:$0xff]
    %v136 = vld [vmem:[%s1 + $0x1b0] sm:$0xff]
    %v137 = vld [vmem:[%s1 + $0x1b8] sm:$0xff]
    %v138 = vld [vmem:[%s1 + $0x1c0] sm:$0xff]
    %v139 = vld [vmem:[%s1 + $0x1c8] sm:$0xff]
    %v140 = vld [vmem:[%s1 + $0x1d0] sm:$0xff]
    %v141 = vld [vmem:[%s1 + $0x1d8] sm:$0xff]
    %v142 = vld [vmem:[%s1 + $0x1e0] sm:$0xff]
    %v143 = vld [vmem:[%s1 + $0x1e8] sm:$0xff]
    %v144 = vld [vmem:[%s1 + $0x1f0] sm:$0xff]
    %v145 = vld [vmem:[%s1 + $0x1f8] sm:$0xff]
    %v146 = vld [vmem:[%s2] sm:$0xff]
    %v147 = vld [vmem:[%s2 + $0x8] sm:$0xff]
    %v148 = vld [vmem:[%s2 + $0x10] sm:$0xff]
    %v149 = vld [vmem:[%s2 + $0x18] sm:$0xff]
    %v150 = vld [vmem:[%s2 + $0x20] sm:$0xff]
    %v151 = vld [vmem:[%s2 + $0x28] sm:$0xff]
    %v152 = vld [vmem:[%s2 + $0x30] sm:$0xff]
    %v153 = vld [vmem:[%s2 + $0x38] sm:$0xff]
    %v154 = vld [vmem:[%s2 + $0x40] sm:$0xff]
    %v155 = vld [vmem:[%s2 + $0x48] sm:$0xff]
    %v156 = vld [vmem:[%s2 + $0x50] sm:$0xff]
    %v157 = vld [vmem:[%s2 + $0x58] sm:$0xff]
    %v158 = vld [vmem:[%s2 + $0x60] sm:$0xff]
    %v159 = vld [vmem:[%s2 + $0x68] sm:$0xff]
    %v160 = vld [vmem:[%s2 + $0x70] sm:$0xff]
    %v161 = vld [vmem:[%s2 + $0x78] sm:$0xff]
    %v162 = vld [vmem:[%s2 + $0x80] sm:$0xff]
    %v163 = vld [vmem:[%s2 + $0x88] sm:$0xff]
    %v164 = vld [vmem:[%s2 + $0x90] sm:$0xff]
    %v165 = vld [vmem:[%s2 + $0x98] sm:$0xff]
    %v166 = vld [vmem:[%s2 + $0xa0] sm:$0xff]
    %v167 = vld [vmem:[%s2 + $0xa8] sm:$0xff]
    %v168 = vld [vmem:[%s2 + $0xb0] sm:$0xff]
    %v169 = vld [vmem:[%s2 + $0xb8] sm:$0xff]
    %v170 = vld [vmem:[%s2 + $0xc0] sm:$0xff]
    %v171 = vld [vmem:[%s2 + $0xc8] sm:$0xff]
    %v172 = vld [vmem:[%s2 + $0xd0] sm:$0xff]
    %v173 = vld [vmem:[%s2 + $0xd8] sm:$0xff]
    %v174 = vld [vmem:[%s2 + $0xe0] sm:$0xff]
    %v175 = vld [vmem:[%s2 + $0xe8] sm:$0xff]
    %v176 = vld [vmem:[%s2 + $0xf0] sm:$0xff]
    %v177 = vld [vmem:[%s2 + $0xf8] sm:$0xff]
    %v178 = vld [vmem:[%s2 + $0x100] sm:$0xff]
    %v179 = vld [vmem:[%s2 + $0x108] sm:$0xff]
    %v180 = vld [vmem:[%s2 + $0x110] sm:$0xff]
    %v181 = vld [vmem:[%s2 + $0x118] sm:$0xff]
    %v182 = vld [vmem:[%s2 + $0x120] sm:$0xff]
    %v183 = vld [vmem:[%s2 + $0x128] sm:$0xff]
    %v184 = vld [vmem:[%s2 + $0x130] sm:$0xff]
    %v185 = vld [vmem:[%s2 + $0x138] sm:$0xff]
    %v186 = vld [vmem:[%s2 + $0x140] sm:$0xff]
    %v187 = vld [vmem:[%s2 + $0x148] sm:$0xff]
    %v188 = vld [vmem:[%s2 + $0x150] sm:$0xff]
    %v189 = vld [vmem:[%s2 + $0x158] sm:$0xff]
    %v190 = vld [vmem:[%s2 + $0x160] sm:$0xff]
    %v191 = vld [vmem:[%s2 + $0x168] sm:$0xff]
    %v192 = vld [vmem:[%s2 + $0x170] sm:$0xff]
    %v193 = vld [vmem:[%s2 + $0x178] sm:$0xff]
    %v194 = vld [vmem:[%s2 + $0x180] sm:$0xff]
    %v195 = vld [vmem:[%s2 + $0x188] sm:$0xff]
    %v196 = vld [vmem:[%s2 + $0x190] sm:$0xff]
    %v197 = vld [vmem:[%s2 + $0x198] sm:$0xff]
    %v198 = vld [vmem:[%s2 + $0x1a0] sm:$0xff]
    %v199 = vld [vmem:[%s2 + $0x1a8] sm:$0xff]
    %v200 = vld [vmem:[%s2 + $0x1b0] sm:$0xff]
    %v201 = vld [vmem:[%s2 + $0x1b8] sm:$0xff]
    %v202 = vld [vmem:[%s2 + $0x1c0] sm:$0xff]
    %v203 = vld [vmem:[%s2 + $0x1c8] sm:$0xff]
    %v204 = vld [vmem:[%s2 + $0x1d0] sm:$0xff]
    %v205 = vld [vmem:[%s2 + $0x1d8] sm:$0xff]
    %v206 = vld [vmem:[%s2 + $0x1e0] sm:$0xff]
    %v207 = vld [vmem:[%s2 + $0x1e8] sm:$0xff]
    %v208 = vld [vmem:[%s2 + $0x1f0] sm:$0xff]
    %v209 = vld [vmem:[%s2 + $0x1f8] sm:$0xff]
    %v210 = vand.u32 2147483647, %v18
    %v211 = vand.u32 2147483647, %v19
    %v212 = vand.u32 2147483647, %v20
    %v213 = vand.u32 2147483647, %v21
    %v214 = vand.u32 2147483647, %v22
    %v215 = vand.u32 2147483647, %v23
    %v216 = vand.u32 2147483647, %v24
    %v217 = vand.u32 2147483647, %v25
    %v218 = vand.u32 2147483647, %v26
    %v219 = vand.u32 2147483647, %v27
    %v220 = vand.u32 2147483647, %v28
    %v221 = vand.u32 2147483647, %v29
    %v222 = vand.u32 2147483647, %v30
    %v223 = vand.u32 2147483647, %v31
    %v224 = vand.u32 2147483647, %v32
    %v225 = vand.u32 2147483647, %v33
    %v226 = vand.u32 2147483647, %v34
    %v227 = vand.u32 2147483647, %v35
    %v228 = vand.u32 2147483647, %v36
    %v229 = vand.u32 2147483647, %v37
    %v230 = vand.u32 2147483647, %v38
    %v231 = vand.u32 2147483647, %v39
    %v232 = vand.u32 2147483647, %v40
    %v233 = vand.u32 2147483647, %v41
    %v234 = vand.u32 2147483647, %v42
    %v235 = vand.u32 2147483647, %v43
    %v236 = vand.u32 2147483647, %v44
    %v237 = vand.u32 2147483647, %v45
    %v238 = vand.u32 2147483647, %v46
    %v239 = vand.u32 2147483647, %v47
    %v240 = vand.u32 2147483647, %v48
    %v241 = vand.u32 2147483647, %v49
    %v242 = vand.u32 2147483647, %v50
    %v243 = vand.u32 2147483647, %v51
    %v244 = vand.u32 2147483647, %v52
    %v245 = vand.u32 2147483647, %v53
    %v246 = vand.u32 2147483647, %v54
    %v247 = vand.u32 2147483647, %v55
    %v248 = vand.u32 2147483647, %v56
    %v249 = vand.u32 2147483647, %v57
    %v250 = vand.u32 2147483647, %v58
    %v251 = vand.u32 2147483647, %v59
    %v252 = vand.u32 2147483647, %v60
    %v253 = vand.u32 2147483647, %v61
    %v254 = vand.u32 2147483647, %v62
    %v255 = vand.u32 2147483647, %v63
    %v256 = vand.u32 2147483647, %v64
    %v257 = vand.u32 2147483647, %v65
    %v258 = vand.u32 2147483647, %v66
    %v259 = vand.u32 2147483647, %v67
    %v260 = vand.u32 2147483647, %v68
    %v261 = vand.u32 2147483647, %v69
    %v262 = vand.u32 2147483647, %v70
    %v263 = vand.u32 2147483647, %v71
    %v264 = vand.u32 2147483647, %v72
    %v265 = vand.u32 2147483647, %v73
    %v266 = vand.u32 2147483647, %v74
    %v267 = vand.u32 2147483647, %v75
    %v268 = vand.u32 2147483647, %v76
    %v269 = vand.u32 2147483647, %v77
    %v270 = vand.u32 2147483647, %v78
    %v271 = vand.u32 2147483647, %v79
    %v272 = vand.u32 2147483647, %v80
    %v273 = vand.u32 2147483647, %v81
    %v274 = vsub.f32 0.0, %v210
    %v275 = vsub.f32 0.0, %v211
    %v276 = vsub.f32 0.0, %v212
    %v277 = vsub.f32 0.0, %v213
    %v278 = vsub.f32 0.0, %v214
    %v279 = vsub.f32 0.0, %v215
    %v280 = vsub.f32 0.0, %v216
    %v281 = vsub.f32 0.0, %v217
    %v282 = vsub.f32 0.0, %v218
    %v283 = vsub.f32 0.0, %v219
    %v284 = vsub.f32 0.0, %v220
    %v285 = vsub.f32 0.0, %v221
    %v286 = vsub.f32 0.0, %v222
    %v287 = vsub.f32 0.0, %v223
    %v288 = vsub.f32 0.0, %v224
    %v289 = vsub.f32 0.0, %v225
    %v290 = vsub.f32 0.0, %v226
    %v291 = vsub.f32 0.0, %v227
    %v292 = vsub.f32 0.0, %v228
    %v293 = vsub.f32 0.0, %v229
    %v294 = vsub.f32 0.0, %v230
    %v295 = vsub.f32 0.0, %v231
    %v296 = vsub.f32 0.0, %v232
    %v297 = vsub.f32 0.0, %v233
    %v298 = vsub.f32 0.0, %v234
    %v299 = vsub.f32 0.0, %v235
    %v300 = vsub.f32 0.0, %v236
    %v301 = vsub.f32 0.0, %v237
    %v302 = vsub.f32 0.0, %v238
    %v303 = vsub.f32 0.0, %v239
    %v304 = vsub.f32 0.0, %v240
    %v305 = vsub.f32 0.0, %v241
    %v306 = vsub.f32 0.0, %v242
    %v307 = vsub.f32 0.0, %v243
    %v308 = vsub.f32 0.0, %v244
    %v309 = vsub.f32 0.0, %v245
    %v310 = vsub.f32 0.0, %v246
    %v311 = vsub.f32 0.0, %v247
    %v312 = vsub.f32 0.0, %v248
    %v313 = vsub.f32 0.0, %v249
    %v314 = vsub.f32 0.0, %v250
    %v315 = vsub.f32 0.0, %v251
    %v316 = vsub.f32 0.0, %v252
    %v317 = vsub.f32 0.0, %v253
    %v318 = vsub.f32 0.0, %v254
    %v319 = vsub.f32 0.0, %v255
    %v320 = vsub.f32 0.0, %v256
    %v321 = vsub.f32 0.0, %v257
    %v322 = vsub.f32 0.0, %v258
    %v323 = vsub.f32 0.0, %v259
    %v324 = vsub.f32 0.0, %v260
    %v325 = vsub.f32 0.0, %v261
    %v326 = vsub.f32 0.0, %v262
    %v327 = vsub.f32 0.0, %v263
    %v328 = vsub.f32 0.0, %v264
    %v329 = vsub.f32 0.0, %v265
    %v330 = vsub.f32 0.0, %v266
    %v331 = vsub.f32 0.0, %v267
    %v332 = vsub.f32 0.0, %v268
    %v333 = vsub.f32 0.0, %v269
    %v334 = vsub.f32 0.0, %v270
    %v335 = vsub.f32 0.0, %v271
    %v336 = vsub.f32 0.0, %v272
    %v337 = vsub.f32 0.0, %v273
    %v338 = vmul.f32 %v274, 1.442695
    %v339 = vpow.pop %v338
    %v340 = vmul.f32 %v275, 1.442695
    %v341 = vpow.pop %v340
    %v342 = vmul.f32 %v276, 1.442695
    %v343 = vpow.pop %v342
    %v344 = vmul.f32 %v277, 1.442695
    %v345 = vpow.pop %v344
    %v346 = vmul.f32 %v278, 1.442695
    %v347 = vpow.pop %v346
    %v348 = vmul.f32 %v279, 1.442695
    %v349 = vpow.pop %v348
    %v350 = vmul.f32 %v280, 1.442695
    %v351 = vpow.pop %v350
    %v352 = vmul.f32 %v281, 1.442695
    %v353 = vpow.pop %v352
    %v354 = vmul.f32 %v282, 1.442695
    %v355 = vpow.pop %v354
    %v356 = vmul.f32 %v283, 1.442695
    %v357 = vpow.pop %v356
    %v358 = vmul.f32 %v284, 1.442695
    %v359 = vpow.pop %v358
    %v360 = vmul.f32 %v285, 1.442695
    %v361 = vpow.pop %v360
    %v362 = vmul.f32 %v286, 1.442695
    %v363 = vpow.pop %v362
    %v364 = vmul.f32 %v287, 1.442695
    %v365 = vpow.pop %v364
    %v366 = vmul.f32 %v288, 1.442695
    %v367 = vpow.pop %v366
    %v368 = vmul.f32 %v289, 1.442695
    %v369 = vpow.pop %v368
    %v370 = vmul.f32 %v290, 1.442695
    %v371 = vpow.pop %v370
    %v372 = vmul.f32 %v291, 1.442695
    %v373 = vpow.pop %v372
    %v374 = vmul.f32 %v292, 1.442695
    %v375 = vpow.pop %v374
    %v376 = vmul.f32 %v293, 1.442695
    %v377 = vpow.pop %v376
    %v378 = vmul.f32 %v294, 1.442695
    %v379 = vpow.pop %v378
    %v380 = vmul.f32 %v295, 1.442695
    %v381 = vpow.pop %v380
    %v382 = vmul.f32 %v296, 1.442695
    %v383 = vpow.pop %v382
    %v384 = vmul.f32 %v297, 1.442695
    %v385 = vpow.pop %v384
    %v386 = vmul.f32 %v298, 1.442695
    %v387 = vpow.pop %v386
    %v388 = vmul.f32 %v299, 1.442695
    %v389 = vpow.pop %v388
    %v390 = vmul.f32 %v300, 1.442695
    %v391 = vpow.pop %v390
    %v392 = vmul.f32 %v301, 1.442695
    %v393 = vpow.pop %v392
    %v394 = vmul.f32 %v302, 1.442695
    %v395 = vpow.pop %v394
    %v396 = vmul.f32 %v303, 1.442695
    %v397 = vpow.pop %v396
    %v398 = vmul.f32 %v304, 1.442695
    %v399 = vpow.pop %v398
    %v400 = vmul.f32 %v305, 1.442695
    %v401 = vpow.pop %v400
    %v402 = vmul.f32 %v306, 1.442695
    %v403 = vpow.pop %v402
    %v404 = vmul.f32 %v307, 1.442695
    %v405 = vpow.pop %v404
    %v406 = vmul.f32 %v308, 1.442695
    %v407 = vpow.pop %v406
    %v408 = vmul.f32 %v309, 1.442695
    %v409 = vpow.pop %v408
    %v410 = vmul.f32 %v310, 1.442695
    %v411 = vpow.pop %v410
    %v412 = vmul.f32 %v311, 1.442695
    %v413 = vpow.pop %v412
    %v414 = vmul.f32 %v312, 1.442695
    %v415 = vpow.pop %v414
    %v416 = vmul.f32 %v313, 1.442695
    %v417 = vpow.pop %v416
    %v418 = vmul.f32 %v314, 1.442695
    %v419 = vpow.pop %v418
    %v420 = vmul.f32 %v315, 1.442695
    %v421 = vpow.pop %v420
    %v422 = vmul.f32 %v316, 1.442695
    %v423 = vpow.pop %v422
    %v424 = vmul.f32 %v317, 1.442695
    %v425 = vpow.pop %v424
    %v426 = vmul.f32 %v318, 1.442695
    %v427 = vpow.pop %v426
    %v428 = vmul.f32 %v319, 1.442695
    %v429 = vpow.pop %v428
    %v430 = vmul.f32 %v320, 1.442695
    %v431 = vpow.pop %v430
    %v432 = vmul.f32 %v321, 1.442695
    %v433 = vpow.pop %v432
    %v434 = vmul.f32 %v322, 1.442695
    %v435 = vpow.pop %v434
    %v436 = vmul.f32 %v323, 1.442695
    %v437 = vpow.pop %v436
    %v438 = vmul.f32 %v324, 1.442695
    %v439 = vpow.pop %v438
    %v440 = vmul.f32 %v325, 1.442695
    %v441 = vpow.pop %v440
    %v442 = vmul.f32 %v326, 1.442695
    %v443 = vpow.pop %v442
    %v444 = vmul.f32 %v327, 1.442695
    %v445 = vpow.pop %v444
    %v446 = vmul.f32 %v328, 1.442695
    %v447 = vpow.pop %v446
    %v448 = vmul.f32 %v329, 1.442695
    %v449 = vpow.pop %v448
    %v450 = vmul.f32 %v330, 1.442695
    %v451 = vpow.pop %v450
    %v452 = vmul.f32 %v331, 1.442695
    %v453 = vpow.pop %v452
    %v454 = vmul.f32 %v332, 1.442695
    %v455 = vpow.pop %v454
    %v456 = vmul.f32 %v333, 1.442695
    %v457 = vpow.pop %v456
    %v458 = vmul.f32 %v334, 1.442695
    %v459 = vpow.pop %v458
    %v460 = vmul.f32 %v335, 1.442695
    %v461 = vpow.pop %v460
    %v462 = vmul.f32 %v336, 1.442695
    %v463 = vpow.pop %v462
    %v464 = vmul.f32 %v337, 1.442695
    %v465 = vpow.pop %v464
    %v466 = vadd.f32 %v339, 1.0
    %v467 = vadd.f32 %v341, 1.0
    %v468 = vadd.f32 %v343, 1.0
    %v469 = vadd.f32 %v345, 1.0
    %v470 = vadd.f32 %v347, 1.0
    %v471 = vadd.f32 %v349, 1.0
    %v472 = vadd.f32 %v351, 1.0
    %v473 = vadd.f32 %v353, 1.0
    %v474 = vadd.f32 %v355, 1.0
    %v475 = vadd.f32 %v357, 1.0
    %v476 = vadd.f32 %v359, 1.0
    %v477 = vadd.f32 %v361, 1.0
    %v478 = vadd.f32 %v363, 1.0
    %v479 = vadd.f32 %v365, 1.0
    %v480 = vadd.f32 %v367, 1.0
    %v481 = vadd.f32 %v369, 1.0
    %v482 = vadd.f32 %v371, 1.0
    %v483 = vadd.f32 %v373, 1.0
    %v484 = vadd.f32 %v375, 1.0
    %v485 = vadd.f32 %v377, 1.0
    %v486 = vadd.f32 %v379, 1.0
    %v487 = vadd.f32 %v381, 1.0
    %v488 = vadd.f32 %v383, 1.0
    %v489 = vadd.f32 %v385, 1.0
    %v490 = vadd.f32 %v387, 1.0
    %v491 = vadd.f32 %v389, 1.0
    %v492 = vadd.f32 %v391, 1.0
    %v493 = vadd.f32 %v393, 1.0
    %v494 = vadd.f32 %v395, 1.0
    %v495 = vadd.f32 %v397, 1.0
    %v496 = vadd.f32 %v399, 1.0
    %v497 = vadd.f32 %v401, 1.0
    %v498 = vadd.f32 %v403, 1.0
    %v499 = vadd.f32 %v405, 1.0
    %v500 = vadd.f32 %v407, 1.0
    %v501 = vadd.f32 %v409, 1.0
    %v502 = vadd.f32 %v411, 1.0
    %v503 = vadd.f32 %v413, 1.0
    %v504 = vadd.f32 %v415, 1.0
    %v505 = vadd.f32 %v417, 1.0
    %v506 = vadd.f32 %v419, 1.0
    %v507 = vadd.f32 %v421, 1.0
    %v508 = vadd.f32 %v423, 1.0
    %v509 = vadd.f32 %v425, 1.0
    %v510 = vadd.f32 %v427, 1.0
    %v511 = vadd.f32 %v429, 1.0
    %v512 = vadd.f32 %v431, 1.0
    %v513 = vadd.f32 %v433, 1.0
    %v514 = vadd.f32 %v435, 1.0
    %v515 = vadd.f32 %v437, 1.0
    %v516 = vadd.f32 %v439, 1.0
    %v517 = vadd.f32 %v441, 1.0
    %v518 = vadd.f32 %v443, 1.0
    %v519 = vadd.f32 %v445, 1.0
    %v520 = vadd.f32 %v447, 1.0
    %v521 = vadd.f32 %v449, 1.0
    %v522 = vadd.f32 %v451, 1.0
    %v523 = vadd.f32 %v453, 1.0
    %v524 = vadd.f32 %v455, 1.0
    %v525 = vadd.f32 %v457, 1.0
    %v526 = vadd.f32 %v459, 1.0
    %v527 = vadd.f32 %v461, 1.0
    %v528 = vadd.f32 %v463, 1.0
    %v529 = vadd.f32 %v465, 1.0
    %v530 = vrcp.pop %v466
    %v531 = vmul.f32 1.0, %v530
    %v532 = vrcp.pop %v467
    %v533 = vmul.f32 1.0, %v532
    %v534 = vrcp.pop %v468
    %v535 = vmul.f32 1.0, %v534
    %v536 = vrcp.pop %v469
    %v537 = vmul.f32 1.0, %v536
    %v538 = vrcp.pop %v470
    %v539 = vmul.f32 1.0, %v538
    %v540 = vrcp.pop %v471
    %v541 = vmul.f32 1.0, %v540
    %v542 = vrcp.pop %v472
    %v543 = vmul.f32 1.0, %v542
    %v544 = vrcp.pop %v473
    %v545 = vmul.f32 1.0, %v544
    %v546 = vrcp.pop %v474
    %v547 = vmul.f32 1.0, %v546
    %v548 = vrcp.pop %v475
    %v549 = vmul.f32 1.0, %v548
    %v550 = vrcp.pop %v476
    %v551 = vmul.f32 1.0, %v550
    %v552 = vrcp.pop %v477
    %v553 = vmul.f32 1.0, %v552
    %v554 = vrcp.pop %v478
    %v555 = vmul.f32 1.0, %v554
    %v556 = vrcp.pop %v479
    %v557 = vmul.f32 1.0, %v556
    %v558 = vrcp.pop %v480
    %v559 = vmul.f32 1.0, %v558
    %v560 = vrcp.pop %v481
    %v561 = vmul.f32 1.0, %v560
    %v562 = vrcp.pop %v482
    %v563 = vmul.f32 1.0, %v562
    %v564 = vrcp.pop %v483
    %v565 = vmul.f32 1.0, %v564
    %v566 = vrcp.pop %v484
    %v567 = vmul.f32 1.0, %v566
    %v568 = vrcp.pop %v485
    %v569 = vmul.f32 1.0, %v568
    %v570 = vrcp.pop %v486
    %v571 = vmul.f32 1.0, %v570
    %v572 = vrcp.pop %v487
    %v573 = vmul.f32 1.0, %v572
    %v574 = vrcp.pop %v488
    %v575 = vmul.f32 1.0, %v574
    %v576 = vrcp.pop %v489
    %v577 = vmul.f32 1.0, %v576
    %v578 = vrcp.pop %v490
    %v579 = vmul.f32 1.0, %v578
    %v580 = vrcp.pop %v491
    %v581 = vmul.f32 1.0, %v580
    %v582 = vrcp.pop %v492
    %v583 = vmul.f32 1.0, %v582
    %v584 = vrcp.pop %v493
    %v585 = vmul.f32 1.0, %v584
    %v586 = vrcp.pop %v494
    %v587 = vmul.f32 1.0, %v586
    %v588 = vrcp.pop %v495
    %v589 = vmul.f32 1.0, %v588
    %v590 = vrcp.pop %v496
    %v591 = vmul.f32 1.0, %v590
    %v592 = vrcp.pop %v497
    %v593 = vmul.f32 1.0, %v592
    %v594 = vrcp.pop %v498
    %v595 = vmul.f32 1.0, %v594
    %v596 = vrcp.pop %v499
    %v597 = vmul.f32 1.0, %v596
    %v598 = vrcp.pop %v500
    %v599 = vmul.f32 1.0, %v598
    %v600 = vrcp.pop %v501
    %v601 = vmul.f32 1.0, %v600
    %v602 = vrcp.pop %v502
    %v603 = vmul.f32 1.0, %v602
    %v604 = vrcp.pop %v503
    %v605 = vmul.f32 1.0, %v604
    %v606 = vrcp.pop %v504
    %v607 = vmul.f32 1.0, %v606
    %v608 = vrcp.pop %v505
    %v609 = vmul.f32 1.0, %v608
    %v610 = vrcp.pop %v506
    %v611 = vmul.f32 1.0, %v610
    %v612 = vrcp.pop %v507
    %v613 = vmul.f32 1.0, %v612
    %v614 = vrcp.pop %v508
    %v615 = vmul.f32 1.0, %v614
    %v616 = vrcp.pop %v509
    %v617 = vmul.f32 1.0, %v616
    %v618 = vrcp.pop %v510
    %v619 = vmul.f32 1.0, %v618
    %v620 = vrcp.pop %v511
    %v621 = vmul.f32 1.0, %v620
    %v622 = vrcp.pop %v512
    %v623 = vmul.f32 1.0, %v622
    %v624 = vrcp.pop %v513
    %v625 = vmul.f32 1.0, %v624
    %v626 = vrcp.pop %v514
    %v627 = vmul.f32 1.0, %v626
    %v628 = vrcp.pop %v515
    %v629 = vmul.f32 1.0, %v628
    %v630 = vrcp.pop %v516
    %v631 = vmul.f32 1.0, %v630
    %v632 = vrcp.pop %v517
    %v633 = vmul.f32 1.0, %v632
    %v634 = vrcp.pop %v518
    %v635 = vmul.f32 1.0, %v634
    %v636 = vrcp.pop %v519
    %v637 = vmul.f32 1.0, %v636
    %v638 = vrcp.pop %v520
    %v639 = vmul.f32 1.0, %v638
    %v640 = vrcp.pop %v521
    %v641 = vmul.f32 1.0, %v640
    %v642 = vrcp.pop %v522
    %v643 = vmul.f32 1.0, %v642
    %v644 = vrcp.pop %v523
    %v645 = vmul.f32 1.0, %v644
    %v646 = vrcp.pop %v524
    %v647 = vmul.f32 1.0, %v646
    %v648 = vrcp.pop %v525
    %v649 = vmul.f32 1.0, %v648
    %v650 = vrcp.pop %v526
    %v651 = vmul.f32 1.0, %v650
    %v652 = vrcp.pop %v527
    %v653 = vmul.f32 1.0, %v652
    %v654 = vrcp.pop %v528
    %v655 = vmul.f32 1.0, %v654
    %v656 = vrcp.pop %v529
    %v657 = vmul.f32 1.0, %v656
    %vm658 = vcmp.ge.f32.partialorder %v18, 0.0
    %vm659 = vcmp.ge.f32.partialorder %v19, 0.0
    %vm660 = vcmp.ge.f32.partialorder %v20, 0.0
    %vm661 = vcmp.ge.f32.partialorder %v21, 0.0
    %vm662 = vcmp.ge.f32.partialorder %v22, 0.0
    %vm663 = vcmp.ge.f32.partialorder %v23, 0.0
    %vm664 = vcmp.ge.f32.partialorder %v24, 0.0
    %vm665 = vcmp.ge.f32.partialorder %v25, 0.0
    %vm666 = vcmp.ge.f32.partialorder %v26, 0.0
    %vm667 = vcmp.ge.f32.partialorder %v27, 0.0
    %vm668 = vcmp.ge.f32.partialorder %v28, 0.0
    %vm669 = vcmp.ge.f32.partialorder %v29, 0.0
    %vm670 = vcmp.ge.f32.partialorder %v30, 0.0
    %vm671 = vcmp.ge.f32.partialorder %v31, 0.0
    %vm672 = vcmp.ge.f32.partialorder %v32, 0.0
    %vm673 = vcmp.ge.f32.partialorder %v33, 0.0
    %vm674 = vcmp.ge.f32.partialorder %v34, 0.0
    %vm675 = vcmp.ge.f32.partialorder %v35, 0.0
    %vm676 = vcmp.ge.f32.partialorder %v36, 0.0
    %vm677 = vcmp.ge.f32.partialorder %v37, 0.0
    %vm678 = vcmp.ge.f32.partialorder %v38, 0.0
    %vm679 = vcmp.ge.f32.partialorder %v39, 0.0
    %vm680 = vcmp.ge.f32.partialorder %v40, 0.0
    %vm681 = vcmp.ge.f32.partialorder %v41, 0.0
    %vm682 = vcmp.ge.f32.partialorder %v42, 0.0
    %vm683 = vcmp.ge.f32.partialorder %v43, 0.0
    %vm684 = vcmp.ge.f32.partialorder %v44, 0.0
    %vm685 = vcmp.ge.f32.partialorder %v45, 0.0
    %vm686 = vcmp.ge.f32.partialorder %v46, 0.0
    %vm687 = vcmp.ge.f32.partialorder %v47, 0.0
    %vm688 = vcmp.ge.f32.partialorder %v48, 0.0
    %vm689 = vcmp.ge.f32.partialorder %v49, 0.0
    %vm690 = vcmp.ge.f32.partialorder %v50, 0.0
    %vm691 = vcmp.ge.f32.partialorder %v51, 0.0
    %vm692 = vcmp.ge.f32.partialorder %v52, 0.0
    %vm693 = vcmp.ge.f32.partialorder %v53, 0.0
    %vm694 = vcmp.ge.f32.partialorder %v54, 0.0
    %vm695 = vcmp.ge.f32.partialorder %v55, 0.0
    %vm696 = vcmp.ge.f32.partialorder %v56, 0.0
    %vm697 = vcmp.ge.f32.partialorder %v57, 0.0
    %vm698 = vcmp.ge.f32.partialorder %v58, 0.0
    %vm699 = vcmp.ge.f32.partialorder %v59, 0.0
    %vm700 = vcmp.ge.f32.partialorder %v60, 0.0
    %vm701 = vcmp.ge.f32.partialorder %v61, 0.0
    %vm702 = vcmp.ge.f32.partialorder %v62, 0.0
    %vm703 = vcmp.ge.f32.partialorder %v63, 0.0
    %vm704 = vcmp.ge.f32.partialorder %v64, 0.0
    %vm705 = vcmp.ge.f32.partialorder %v65, 0.0
    %vm706 = vcmp.ge.f32.partialorder %v66, 0.0
    %vm707 = vcmp.ge.f32.partialorder %v67, 0.0
    %vm708 = vcmp.ge.f32.partialorder %v68, 0.0
    %vm709 = vcmp.ge.f32.partialorder %v69, 0.0
    %vm710 = vcmp.ge.f32.partialorder %v70, 0.0
    %vm711 = vcmp.ge.f32.partialorder %v71, 0.0
    %vm712 = vcmp.ge.f32.partialorder %v72, 0.0
    %vm713 = vcmp.ge.f32.partialorder %v73, 0.0
    %vm714 = vcmp.ge.f32.partialorder %v74, 0.0
    %vm715 = vcmp.ge.f32.partialorder %v75, 0.0
    %vm716 = vcmp.ge.f32.partialorder %v76, 0.0
    %vm717 = vcmp.ge.f32.partialorder %v77, 0.0
    %vm718 = vcmp.ge.f32.partialorder %v78, 0.0
    %vm719 = vcmp.ge.f32.partialorder %v79, 0.0
    %vm720 = vcmp.ge.f32.partialorder %v80, 0.0
    %vm721 = vcmp.ge.f32.partialorder %v81, 0.0
    %v722 = vmul.f32 %v339, %v531
    %v723 = vmul.f32 %v341, %v533
    %v724 = vmul.f32 %v343, %v535
    %v725 = vmul.f32 %v345, %v537
    %v726 = vmul.f32 %v347, %v539
    %v727 = vmul.f32 %v349, %v541
    %v728 = vmul.f32 %v351, %v543
    %v729 = vmul.f32 %v353, %v545
    %v730 = vmul.f32 %v355, %v547
    %v731 = vmul.f32 %v357, %v549
    %v732 = vmul.f32 %v359, %v551
    %v733 = vmul.f32 %v361, %v553
    %v734 = vmul.f32 %v363, %v555
    %v735 = vmul.f32 %v365, %v557
    %v736 = vmul.f32 %v367, %v559
    %v737 = vmul.f32 %v369, %v561
    %v738 = vmul.f32 %v371, %v563
    %v739 = vmul.f32 %v373, %v565
    %v740 = vmul.f32 %v375, %v567
    %v741 = vmul.f32 %v377, %v569
    %v742 = vmul.f32 %v379, %v571
    %v743 = vmul.f32 %v381, %v573
    %v744 = vmul.f32 %v383, %v575
    %v745 = vmul.f32 %v385, %v577
    %v746 = vmul.f32 %v387, %v579
    %v747 = vmul.f32 %v389, %v581
    %v748 = vmul.f32 %v391, %v583
    %v749 = vmul.f32 %v393, %v585
    %v750 = vmul.f32 %v395, %v587
    %v751 = vmul.f32 %v397, %v589
    %v752 = vmul.f32 %v399, %v591
    %v753 = vmul.f32 %v401, %v593
    %v754 = vmul.f32 %v403, %v595
    %v755 = vmul.f32 %v405, %v597
    %v756 = vmul.f32 %v407, %v599
    %v757 = vmul.f32 %v409, %v601
    %v758 = vmul.f32 %v411, %v603
    %v759 = vmul.f32 %v413, %v605
    %v760 = vmul.f32 %v415, %v607
    %v761 = vmul.f32 %v417, %v609
    %v762 = vmul.f32 %v419, %v611
    %v763 = vmul.f32 %v421, %v613
    %v764 = vmul.f32 %v423, %v615
    %v765 = vmul.f32 %v425, %v617
    %v766 = vmul.f32 %v427, %v619
    %v767 = vmul.f32 %v429, %v621
    %v768 = vmul.f32 %v431, %v623
    %v769 = vmul.f32 %v433, %v625
    %v770 = vmul.f32 %v435, %v627
    %v771 = vmul.f32 %v437, %v629
    %v772 = vmul.f32 %v439, %v631
    %v773 = vmul.f32 %v441, %v633
    %v774 = vmul.f32 %v443, %v635
    %v775 = vmul.f32 %v445, %v637
    %v776 = vmul.f32 %v447, %v639
    %v777 = vmul.f32 %v449, %v641
    %v778 = vmul.f32 %v451, %v643
    %v779 = vmul.f32 %v453, %v645
    %v780 = vmul.f32 %v455, %v647
    %v781 = vmul.f32 %v457, %v649
    %v782 = vmul.f32 %v459, %v651
    %v783 = vmul.f32 %v461, %v653
    %v784 = vmul.f32 %v463, %v655
    %v785 = vmul.f32 %v465, %v657
    %v786 = vsel %vm658, %v531, %v722
    %v787 = vsel %vm659, %v533, %v723
    %v788 = vsel %vm660, %v535, %v724
    %v789 = vsel %vm661, %v537, %v725
    %v790 = vsel %vm662, %v539, %v726
    %v791 = vsel %vm663, %v541, %v727
    %v792 = vsel %vm664, %v543, %v728
    %v793 = vsel %vm665, %v545, %v729
    %v794 = vsel %vm666, %v547, %v730
    %v795 = vsel %vm667, %v549, %v731
    %v796 = vsel %vm668, %v551, %v732
    %v797 = vsel %vm669, %v553, %v733
    %v798 = vsel %vm670, %v555, %v734
    %v799 = vsel %vm671, %v557, %v735
    %v800 = vsel %vm672, %v559, %v736
    %v801 = vsel %vm673, %v561, %v737
    %v802 = vsel %vm674, %v563, %v738
    %v803 = vsel %vm675, %v565, %v739
    %v804 = vsel %vm676, %v567, %v740
    %v805 = vsel %vm677, %v569, %v741
    %v806 = vsel %vm678, %v571, %v742
    %v807 = vsel %vm679, %v573, %v743
    %v808 = vsel %vm680, %v575, %v744
    %v809 = vsel %vm681, %v577, %v745
    %v810 = vsel %vm682, %v579, %v746
    %v811 = vsel %vm683, %v581, %v747
    %v812 = vsel %vm684, %v583, %v748
    %v813 = vsel %vm685, %v585, %v749
    %v814 = vsel %vm686, %v587, %v750
    %v815 = vsel %vm687, %v589, %v751
    %v816 = vsel %vm688, %v591, %v752
    %v817 = vsel %vm689, %v593, %v753
    %v818 = vsel %vm690, %v595, %v754
    %v819 = vsel %vm691, %v597, %v755
    %v820 = vsel %vm692, %v599, %v756
    %v821 = vsel %vm693, %v601, %v757
    %v822 = vsel %vm694, %v603, %v758
    %v823 = vsel %vm695, %v605, %v759
    %v824 = vsel %vm696, %v607, %v760
    %v825 = vsel %vm697, %v609, %v761
    %v826 = vsel %vm698, %v611, %v762
    %v827 = vsel %vm699, %v613, %v763
    %v828 = vsel %vm700, %v615, %v764
    %v829 = vsel %vm701, %v617, %v765
    %v830 = vsel %vm702, %v619, %v766
    %v831 = vsel %vm703, %v621, %v767
    %v832 = vsel %vm704, %v623, %v768
    %v833 = vsel %vm705, %v625, %v769
    %v834 = vsel %vm706, %v627, %v770
    %v835 = vsel %vm707, %v629, %v771
    %v836 = vsel %vm708, %v631, %v772
    %v837 = vsel %vm709, %v633, %v773
    %v838 = vsel %vm710, %v635, %v774
    %v839 = vsel %vm711, %v637, %v775
    %v840 = vsel %vm712, %v639, %v776
    %v841 = vsel %vm713, %v641, %v777
    %v842 = vsel %vm714, %v643, %v778
    %v843 = vsel %vm715, %v645, %v779
    %v844 = vsel %vm716, %v647, %v780
    %v845 = vsel %vm717, %v649, %v781
    %v846 = vsel %vm718, %v651, %v782
    %v847 = vsel %vm719, %v653, %v783
    %v848 = vsel %vm720, %v655, %v784
    %v849 = vsel %vm721, %v657, %v785
    %v850 = vmax.f32 %v18, 0.0
    %v851 = vmax.f32 %v19, 0.0
    %v852 = vmax.f32 %v20, 0.0
    %v853 = vmax.f32 %v21, 0.0
    %v854 = vmax.f32 %v22, 0.0
    %v855 = vmax.f32 %v23, 0.0
    %v856 = vmax.f32 %v24, 0.0
    %v857 = vmax.f32 %v25, 0.0
    %v858 = vmax.f32 %v26, 0.0
    %v859 = vmax.f32 %v27, 0.0
    %v860 = vmax.f32 %v28, 0.0
    %v861 = vmax.f32 %v29, 0.0
    %v862 = vmax.f32 %v30, 0.0
    %v863 = vmax.f32 %v31, 0.0
    %v864 = vmax.f32 %v32, 0.0
    %v865 = vmax.f32 %v33, 0.0
    %v866 = vmax.f32 %v34, 0.0
    %v867 = vmax.f32 %v35, 0.0
    %v868 = vmax.f32 %v36, 0.0
    %v869 = vmax.f32 %v37, 0.0
    %v870 = vmax.f32 %v38, 0.0
    %v871 = vmax.f32 %v39, 0.0
    %v872 = vmax.f32 %v40, 0.0
    %v873 = vmax.f32 %v41, 0.0
    %v874 = vmax.f32 %v42, 0.0
    %v875 = vmax.f32 %v43, 0.0
    %v876 = vmax.f32 %v44, 0.0
    %v877 = vmax.f32 %v45, 0.0
    %v878 = vmax.f32 %v46, 0.0
    %v879 = vmax.f32 %v47, 0.0
    %v880 = vmax.f32 %v48, 0.0
    %v881 = vmax.f32 %v49, 0.0
    %v882 = vmax.f32 %v50, 0.0
    %v883 = vmax.f32 %v51, 0.0
    %v884 = vmax.f32 %v52, 0.0
    %v885 = vmax.f32 %v53, 0.0
    %v886 = vmax.f32 %v54, 0.0
    %v887 = vmax.f32 %v55, 0.0
    %v888 = vmax.f32 %v56, 0.0
    %v889 = vmax.f32 %v57, 0.0
    %v890 = vmax.f32 %v58, 0.0
    %v891 = vmax.f32 %v59, 0.0
    %v892 = vmax.f32 %v60, 0.0
    %v893 = vmax.f32 %v61, 0.0
    %v894 = vmax.f32 %v62, 0.0
    %v895 = vmax.f32 %v63, 0.0
    %v896 = vmax.f32 %v64, 0.0
    %v897 = vmax.f32 %v65, 0.0
    %v898 = vmax.f32 %v66, 0.0
    %v899 = vmax.f32 %v67, 0.0
    %v900 = vmax.f32 %v68, 0.0
    %v901 = vmax.f32 %v69, 0.0
    %v902 = vmax.f32 %v70, 0.0
    %v903 = vmax.f32 %v71, 0.0
    %v904 = vmax.f32 %v72, 0.0
    %v905 = vmax.f32 %v73, 0.0
    %v906 = vmax.f32 %v74, 0.0
    %v907 = vmax.f32 %v75, 0.0
    %v908 = vmax.f32 %v76, 0.0
    %v909 = vmax.f32 %v77, 0.0
    %v910 = vmax.f32 %v78, 0.0
    %v911 = vmax.f32 %v79, 0.0
    %v912 = vmax.f32 %v80, 0.0
    %v913 = vmax.f32 %v81, 0.0
    %v914 = vmul.f32 %v18, %v82
    %v915 = vmul.f32 %v19, %v83
    %v916 = vmul.f32 %v20, %v84
    %v917 = vmul.f32 %v21, %v85
    %v918 = vmul.f32 %v22, %v86
    %v919 = vmul.f32 %v23, %v87
    %v920 = vmul.f32 %v24, %v88
    %v921 = vmul.f32 %v25, %v89
    %v922 = vmul.f32 %v26, %v90
    %v923 = vmul.f32 %v27, %v91
    %v924 = vmul.f32 %v28, %v92
    %v925 = vmul.f32 %v29, %v93
    %v926 = vmul.f32 %v30, %v94
    %v927 = vmul.f32 %v31, %v95
    %v928 = vmul.f32 %v32, %v96
    %v929 = vmul.f32 %v33, %v97
    %v930 = vmul.f32 %v34, %v98
    %v931 = vmul.f32 %v35, %v99
    %v932 = vmul.f32 %v36, %v100
    %v933 = vmul.f32 %v37, %v101
    %v934 = vmul.f32 %v38, %v102
    %v935 = vmul.f32 %v39, %v103
    %v936 = vmul.f32 %v40, %v104
    %v937 = vmul.f32 %v41, %v105
    %v938 = vmul.f32 %v42, %v106
    %v939 = vmul.f32 %v43, %v107
    %v940 = vmul.f32 %v44, %v108
    %v941 = vmul.f32 %v45, %v109
    %v942 = vmul.f32 %v46, %v110
    %v943 = vmul.f32 %v47, %v111
    %v944 = vmul.f32 %v48, %v112
    %v945 = vmul.f32 %v49, %v113
    %v946 = vmul.f32 %v50, %v114
    %v947 = vmul.f32 %v51, %v115
    %v948 = vmul.f32 %v52, %v116
    %v949 = vmul.f32 %v53, %v117
    %v950 = vmul.f32 %v54, %v118
    %v951 = vmul.f32 %v55, %v119
    %v952 = vmul.f32 %v56, %v120
    %v953 = vmul.f32 %v57, %v121
    %v954 = vmul.f32 %v58, %v122
    %v955 = vmul.f32 %v59, %v123
    %v956 = vmul.f32 %v60, %v124
    %v957 = vmul.f32 %v61, %v125
    %v958 = vmul.f32 %v62, %v126
    %v959 = vmul.f32 %v63, %v127
    %v960 = vmul.f32 %v64, %v128
    %v961 = vmul.f32 %v65, %v129
    %v962 = vmul.f32 %v66, %v130
    %v963 = vmul.f32 %v67, %v131
    %v964 = vmul.f32 %v68, %v132
    %v965 = vmul.f32 %v69, %v133
    %v966 = vmul.f32 %v70, %v134
    %v967 = vmul.f32 %v71, %v135
    %v968 = vmul.f32 %v72, %v136
    %v969 = vmul.f32 %v73, %v137
    %v970 = vmul.f32 %v74, %v138
    %v971 = vmul.f32 %v75, %v139
    %v972 = vmul.f32 %v76, %v140
    %v973 = vmul.f32 %v77, %v141
    %v974 = vmul.f32 %v78, %v142
    %v975 = vmul.f32 %v79, %v143
    %v976 = vmul.f32 %v80, %v144
    %v977 = vmul.f32 %v81, %v145
    %v978 = vsub.f32 %v850, %v914
    %v979 = vsub.f32 %v851, %v915
    %v980 = vsub.f32 %v852, %v916
    %v981 = vsub.f32 %v853, %v917
    %v982 = vsub.f32 %v854, %v918
    %v983 = vsub.f32 %v855, %v919
    %v984 = vsub.f32 %v856, %v920
    %v985 = vsub.f32 %v857, %v921
    %v986 = vsub.f32 %v858, %v922
    %v987 = vsub.f32 %v859, %v923
    %v988 = vsub.f32 %v860, %v924
    %v989 = vsub.f32 %v861, %v925
    %v990 = vsub.f32 %v862, %v926
    %v991 = vsub.f32 %v863, %v927
    %v992 = vsub.f32 %v864, %v928
    %v993 = vsub.f32 %v865, %v929
    %v994 = vsub.f32 %v866, %v930
    %v995 = vsub.f32 %v867, %v931
    %v996 = vsub.f32 %v868, %v932
    %v997 = vsub.f32 %v869, %v933
    %v998 = vsub.f32 %v870, %v934
    %v999 = vsub.f32 %v871, %v935
    %v1000 = vsub.f32 %v872, %v936
    %v1001 = vsub.f32 %v873, %v937
    %v1002 = vsub.f32 %v874, %v938
    %v1003 = vsub.f32 %v875, %v939
    %v1004 = vsub.f32 %v876, %v940
    %v1005 = vsub.f32 %v877, %v941
    %v1006 = vsub.f32 %v878, %v942
    %v1007 = vsub.f32 %v879, %v943
    %v1008 = vsub.f32 %v880, %v944
    %v1009 = vsub.f32 %v881, %v945
    %v1010 = vsub.f32 %v882, %v946
    %v1011 = vsub.f32 %v883, %v947
    %v1012 = vsub.f32 %v884, %v948
    %v1013 = vsub.f32 %v885, %v949
    %v1014 = vsub.f32 %v886, %v950
    %v1015 = vsub.f32 %v887, %v951
    %v1016 = vsub.f32 %v888, %v952
    %v1017 = vsub.f32 %v889, %v953
    %v1018 = vsub.f32 %v890, %v954
    %v1019 = vsub.f32 %v891, %v955
    %v1020 = vsub.f32 %v892, %v956
    %v1021 = vsub.f32 %v893, %v957
    %v1022 = vsub.f32 %v894, %v958
    %v1023 = vsub.f32 %v895, %v959
    %v1024 = vsub.f32 %v896, %v960
    %v1025 = vsub.f32 %v897, %v961
    %v1026 = vsub.f32 %v898, %v962
    %v1027 = vsub.f32 %v899, %v963
    %v1028 = vsub.f32 %v900, %v964
    %v1029 = vsub.f32 %v901, %v965
    %v1030 = vsub.f32 %v902, %v966
    %v1031 = vsub.f32 %v903, %v967
    %v1032 = vsub.f32 %v904, %v968
    %v1033 = vsub.f32 %v905, %v969
    %v1034 = vsub.f32 %v906, %v970
    %v1035 = vsub.f32 %v907, %v971
    %v1036 = vsub.f32 %v908, %v972
    %v1037 = vsub.f32 %v909, %v973
    %v1038 = vsub.f32 %v910, %v974
    %v1039 = vsub.f32 %v911, %v975
    %v1040 = vsub.f32 %v912, %v976
    %v1041 = vsub.f32 %v913, %v977
    %v1042 = vadd.f32 %v339, 1.0
    %v1043 = vlog2.pop %v1042
    %v1044 = vmul.f32 %v1043, 0.6931472
    %v1045 = vmul.f32 -0.5, %v339
    %v1046 = vadd.f32 %v1045, 1.0
    %v1047 = vmul.f32 %v1046, %v339
    %v1048 = vand.u32 2147483647, %v339
    %vm1049 = vcmp.lt.f32.partialorder %v1048, 0.0004427343
    %v1050 = vsel %vm1049, %v1047, %v1044
    %v1051 = vadd.f32 %v341, 1.0
    %v1052 = vlog2.pop %v1051
    %v1053 = vmul.f32 %v1052, 0.6931472
    %v1054 = vmul.f32 -0.5, %v341
    %v1055 = vadd.f32 %v1054, 1.0
    %v1056 = vmul.f32 %v1055, %v341
    %v1057 = vand.u32 2147483647, %v341
    %vm1058 = vcmp.lt.f32.partialorder %v1057, 0.0004427343
    %v1059 = vsel %vm1058, %v1056, %v1053
    %v1060 = vadd.f32 %v343, 1.0
    %v1061 = vlog2.pop %v1060
    %v1062 = vmul.f32 %v1061, 0.6931472
    %v1063 = vmul.f32 -0.5, %v343
    %v1064 = vadd.f32 %v1063, 1.0
    %v1065 = vmul.f32 %v1064, %v343
    %v1066 = vand.u32 2147483647, %v343
    %vm1067 = vcmp.lt.f32.partialorder %v1066, 0.0004427343
    %v1068 = vsel %vm1067, %v1065, %v1062
    %v1069 = vadd.f32 %v345, 1.0
    %v1070 = vlog2.pop %v1069
    %v1071 = vmul.f32 %v1070, 0.6931472
    %v1072 = vmul.f32 -0.5, %v345
    %v1073 = vadd.f32 %v1072, 1.0
    %v1074 = vmul.f32 %v1073, %v345
    %v1075 = vand.u32 2147483647, %v345
    %vm1076 = vcmp.lt.f32.partialorder %v1075, 0.0004427343
    %v1077 = vsel %vm1076, %v1074, %v1071
    %v1078 = vadd.f32 %v347, 1.0
    %v1079 = vlog2.pop %v1078
    %v1080 = vmul.f32 %v1079, 0.6931472
    %v1081 = vmul.f32 -0.5, %v347
    %v1082 = vadd.f32 %v1081, 1.0
    %v1083 = vmul.f32 %v1082, %v347
    %v1084 = vand.u32 2147483647, %v347
    %vm1085 = vcmp.lt.f32.partialorder %v1084, 0.0004427343
    %v1086 = vsel %vm1085, %v1083, %v1080
    %v1087 = vadd.f32 %v349, 1.0
    %v1088 = vlog2.pop %v1087
    %v1089 = vmul.f32 %v1088, 0.6931472
    %v1090 = vmul.f32 -0.5, %v349
    %v1091 = vadd.f32 %v1090, 1.0
    %v1092 = vmul.f32 %v1091, %v349
    %v1093 = vand.u32 2147483647, %v349
    %vm1094 = vcmp.lt.f32.partialorder %v1093, 0.0004427343
    %v1095 = vsel %vm1094, %v1092, %v1089
    %v1096 = vadd.f32 %v351, 1.0
    %v1097 = vlog2.pop %v1096
    %v1098 = vmul.f32 %v1097, 0.6931472
    %v1099 = vmul.f32 -0.5, %v351
    %v1100 = vadd.f32 %v1099, 1.0
    %v1101 = vmul.f32 %v1100, %v351
    %v1102 = vand.u32 2147483647, %v351
    %vm1103 = vcmp.lt.f32.partialorder %v1102, 0.0004427343
    %v1104 = vsel %vm1103, %v1101, %v1098
    %v1105 = vadd.f32 %v353, 1.0
    %v1106 = vlog2.pop %v1105
    %v1107 = vmul.f32 %v1106, 0.6931472
    %v1108 = vmul.f32 -0.5, %v353
    %v1109 = vadd.f32 %v1108, 1.0
    %v1110 = vmul.f32 %v1109, %v353
    %v1111 = vand.u32 2147483647, %v353
    %vm1112 = vcmp.lt.f32.partialorder %v1111, 0.0004427343
    %v1113 = vsel %vm1112, %v1110, %v1107
    %v1114 = vadd.f32 %v355, 1.0
    %v1115 = vlog2.pop %v1114
    %v1116 = vmul.f32 %v1115, 0.6931472
    %v1117 = vmul.f32 -0.5, %v355
    %v1118 = vadd.f32 %v1117, 1.0
    %v1119 = vmul.f32 %v1118, %v355
    %v1120 = vand.u32 2147483647, %v355
    %vm1121 = vcmp.lt.f32.partialorder %v1120, 0.0004427343
    %v1122 = vsel %vm1121, %v1119, %v1116
    %v1123 = vadd.f32 %v357, 1.0
    %v1124 = vlog2.pop %v1123
    %v1125 = vmul.f32 %v1124, 0.6931472
    %v1126 = vmul.f32 -0.5, %v357
    %v1127 = vadd.f32 %v1126, 1.0
    %v1128 = vmul.f32 %v1127, %v357
    %v1129 = vand.u32 2147483647, %v357
    %vm1130 = vcmp.lt.f32.partialorder %v1129, 0.0004427343
    %v1131 = vsel %vm1130, %v1128, %v1125
    %v1132 = vadd.f32 %v359, 1.0
    %v1133 = vlog2.pop %v1132
    %v1134 = vmul.f32 %v1133, 0.6931472
    %v1135 = vmul.f32 -0.5, %v359
    %v1136 = vadd.f32 %v1135, 1.0
    %v1137 = vmul.f32 %v1136, %v359
    %v1138 = vand.u32 2147483647, %v359
    %vm1139 = vcmp.lt.f32.partialorder %v1138, 0.0004427343
    %v1140 = vsel %vm1139, %v1137, %v1134
    %v1141 = vadd.f32 %v361, 1.0
    %v1142 = vlog2.pop %v1141
    %v1143 = vmul.f32 %v1142, 0.6931472
    %v1144 = vmul.f32 -0.5, %v361
    %v1145 = vadd.f32 %v1144, 1.0
    %v1146 = vmul.f32 %v1145, %v361
    %v1147 = vand.u32 2147483647, %v361
    %vm1148 = vcmp.lt.f32.partialorder %v1147, 0.0004427343
    %v1149 = vsel %vm1148, %v1146, %v1143
    %v1150 = vadd.f32 %v363, 1.0
    %v1151 = vlog2.pop %v1150
    %v1152 = vmul.f32 %v1151, 0.6931472
    %v1153 = vmul.f32 -0.5, %v363
    %v1154 = vadd.f32 %v1153, 1.0
    %v1155 = vmul.f32 %v1154, %v363
    %v1156 = vand.u32 2147483647, %v363
    %vm1157 = vcmp.lt.f32.partialorder %v1156, 0.0004427343
    %v1158 = vsel %vm1157, %v1155, %v1152
    %v1159 = vadd.f32 %v365, 1.0
    %v1160 = vlog2.pop %v1159
    %v1161 = vmul.f32 %v1160, 0.6931472
    %v1162 = vmul.f32 -0.5, %v365
    %v1163 = vadd.f32 %v1162, 1.0
    %v1164 = vmul.f32 %v1163, %v365
    %v1165 = vand.u32 2147483647, %v365
    %vm1166 = vcmp.lt.f32.partialorder %v1165, 0.0004427343
    %v1167 = vsel %vm1166, %v1164, %v1161
    %v1168 = vadd.f32 %v367, 1.0
    %v1169 = vlog2.pop %v1168
    %v1170 = vmul.f32 %v1169, 0.6931472
    %v1171 = vmul.f32 -0.5, %v367
    %v1172 = vadd.f32 %v1171, 1.0
    %v1173 = vmul.f32 %v1172, %v367
    %v1174 = vand.u32 2147483647, %v367
    %vm1175 = vcmp.lt.f32.partialorder %v1174, 0.0004427343
    %v1176 = vsel %vm1175, %v1173, %v1170
    %v1177 = vadd.f32 %v369, 1.0
    %v1178 = vlog2.pop %v1177
    %v1179 = vmul.f32 %v1178, 0.6931472
    %v1180 = vmul.f32 -0.5, %v369
    %v1181 = vadd.f32 %v1180, 1.0
    %v1182 = vmul.f32 %v1181, %v369
    %v1183 = vand.u32 2147483647, %v369
    %vm1184 = vcmp.lt.f32.partialorder %v1183, 0.0004427343
    %v1185 = vsel %vm1184, %v1182, %v1179
    %v1186 = vadd.f32 %v371, 1.0
    %v1187 = vlog2.pop %v1186
    %v1188 = vmul.f32 %v1187, 0.6931472
    %v1189 = vmul.f32 -0.5, %v371
    %v1190 = vadd.f32 %v1189, 1.0
    %v1191 = vmul.f32 %v1190, %v371
    %v1192 = vand.u32 2147483647, %v371
    %vm1193 = vcmp.lt.f32.partialorder %v1192, 0.0004427343
    %v1194 = vsel %vm1193, %v1191, %v1188
    %v1195 = vadd.f32 %v373, 1.0
    %v1196 = vlog2.pop %v1195
    %v1197 = vmul.f32 %v1196, 0.6931472
    %v1198 = vmul.f32 -0.5, %v373
    %v1199 = vadd.f32 %v1198, 1.0
    %v1200 = vmul.f32 %v1199, %v373
    %v1201 = vand.u32 2147483647, %v373
    %vm1202 = vcmp.lt.f32.partialorder %v1201, 0.0004427343
    %v1203 = vsel %vm1202, %v1200, %v1197
    %v1204 = vadd.f32 %v375, 1.0
    %v1205 = vlog2.pop %v1204
    %v1206 = vmul.f32 %v1205, 0.6931472
    %v1207 = vmul.f32 -0.5, %v375
    %v1208 = vadd.f32 %v1207, 1.0
    %v1209 = vmul.f32 %v1208, %v375
    %v1210 = vand.u32 2147483647, %v375
    %vm1211 = vcmp.lt.f32.partialorder %v1210, 0.0004427343
    %v1212 = vsel %vm1211, %v1209, %v1206
    %v1213 = vadd.f32 %v377, 1.0
    %v1214 = vlog2.pop %v1213
    %v1215 = vmul.f32 %v1214, 0.6931472
    %v1216 = vmul.f32 -0.5, %v377
    %v1217 = vadd.f32 %v1216, 1.0
    %v1218 = vmul.f32 %v1217, %v377
    %v1219 = vand.u32 2147483647, %v377
    %vm1220 = vcmp.lt.f32.partialorder %v1219, 0.0004427343
    %v1221 = vsel %vm1220, %v1218, %v1215
    %v1222 = vadd.f32 %v379, 1.0
    %v1223 = vlog2.pop %v1222
    %v1224 = vmul.f32 %v1223, 0.6931472
    %v1225 = vmul.f32 -0.5, %v379
    %v1226 = vadd.f32 %v1225, 1.0
    %v1227 = vmul.f32 %v1226, %v379
    %v1228 = vand.u32 2147483647, %v379
    %vm1229 = vcmp.lt.f32.partialorder %v1228, 0.0004427343
    %v1230 = vsel %vm1229, %v1227, %v1224
    %v1231 = vadd.f32 %v381, 1.0
    %v1232 = vlog2.pop %v1231
    %v1233 = vmul.f32 %v1232, 0.6931472
    %v1234 = vmul.f32 -0.5, %v381
    %v1235 = vadd.f32 %v1234, 1.0
    %v1236 = vmul.f32 %v1235, %v381
    %v1237 = vand.u32 2147483647, %v381
    %vm1238 = vcmp.lt.f32.partialorder %v1237, 0.0004427343
    %v1239 = vsel %vm1238, %v1236, %v1233
    %v1240 = vadd.f32 %v383, 1.0
    %v1241 = vlog2.pop %v1240
    %v1242 = vmul.f32 %v1241, 0.6931472
    %v1243 = vmul.f32 -0.5, %v383
    %v1244 = vadd.f32 %v1243, 1.0
    %v1245 = vmul.f32 %v1244, %v383
    %v1246 = vand.u32 2147483647, %v383
    %vm1247 = vcmp.lt.f32.partialorder %v1246, 0.0004427343
    %v1248 = vsel %vm1247, %v1245, %v1242
    %v1249 = vadd.f32 %v385, 1.0
    %v1250 = vlog2.pop %v1249
    %v1251 = vmul.f32 %v1250, 0.6931472
    %v1252 = vmul.f32 -0.5, %v385
    %v1253 = vadd.f32 %v1252, 1.0
    %v1254 = vmul.f32 %v1253, %v385
    %v1255 = vand.u32 2147483647, %v385
    %vm1256 = vcmp.lt.f32.partialorder %v1255, 0.0004427343
    %v1257 = vsel %vm1256, %v1254, %v1251
    %v1258 = vadd.f32 %v387, 1.0
    %v1259 = vlog2.pop %v1258
    %v1260 = vmul.f32 %v1259, 0.6931472
    %v1261 = vmul.f32 -0.5, %v387
    %v1262 = vadd.f32 %v1261, 1.0
    %v1263 = vmul.f32 %v1262, %v387
    %v1264 = vand.u32 2147483647, %v387
    %vm1265 = vcmp.lt.f32.partialorder %v1264, 0.0004427343
    %v1266 = vsel %vm1265, %v1263, %v1260
    %v1267 = vadd.f32 %v389, 1.0
    %v1268 = vlog2.pop %v1267
    %v1269 = vmul.f32 %v1268, 0.6931472
    %v1270 = vmul.f32 -0.5, %v389
    %v1271 = vadd.f32 %v1270, 1.0
    %v1272 = vmul.f32 %v1271, %v389
    %v1273 = vand.u32 2147483647, %v389
    %vm1274 = vcmp.lt.f32.partialorder %v1273, 0.0004427343
    %v1275 = vsel %vm1274, %v1272, %v1269
    %v1276 = vadd.f32 %v391, 1.0
    %v1277 = vlog2.pop %v1276
    %v1278 = vmul.f32 %v1277, 0.6931472
    %v1279 = vmul.f32 -0.5, %v391
    %v1280 = vadd.f32 %v1279, 1.0
    %v1281 = vmul.f32 %v1280, %v391
    %v1282 = vand.u32 2147483647, %v391
    %vm1283 = vcmp.lt.f32.partialorder %v1282, 0.0004427343
    %v1284 = vsel %vm1283, %v1281, %v1278
    %v1285 = vadd.f32 %v393, 1.0
    %v1286 = vlog2.pop %v1285
    %v1287 = vmul.f32 %v1286, 0.6931472
    %v1288 = vmul.f32 -0.5, %v393
    %v1289 = vadd.f32 %v1288, 1.0
    %v1290 = vmul.f32 %v1289, %v393
    %v1291 = vand.u32 2147483647, %v393
    %vm1292 = vcmp.lt.f32.partialorder %v1291, 0.0004427343
    %v1293 = vsel %vm1292, %v1290, %v1287
    %v1294 = vadd.f32 %v395, 1.0
    %v1295 = vlog2.pop %v1294
    %v1296 = vmul.f32 %v1295, 0.6931472
    %v1297 = vmul.f32 -0.5, %v395
    %v1298 = vadd.f32 %v1297, 1.0
    %v1299 = vmul.f32 %v1298, %v395
    %v1300 = vand.u32 2147483647, %v395
    %vm1301 = vcmp.lt.f32.partialorder %v1300, 0.0004427343
    %v1302 = vsel %vm1301, %v1299, %v1296
    %v1303 = vadd.f32 %v397, 1.0
    %v1304 = vlog2.pop %v1303
    %v1305 = vmul.f32 %v1304, 0.6931472
    %v1306 = vmul.f32 -0.5, %v397
    %v1307 = vadd.f32 %v1306, 1.0
    %v1308 = vmul.f32 %v1307, %v397
    %v1309 = vand.u32 2147483647, %v397
    %vm1310 = vcmp.lt.f32.partialorder %v1309, 0.0004427343
    %v1311 = vsel %vm1310, %v1308, %v1305
    %v1312 = vadd.f32 %v399, 1.0
    %v1313 = vlog2.pop %v1312
    %v1314 = vmul.f32 %v1313, 0.6931472
    %v1315 = vmul.f32 -0.5, %v399
    %v1316 = vadd.f32 %v1315, 1.0
    %v1317 = vmul.f32 %v1316, %v399
    %v1318 = vand.u32 2147483647, %v399
    %vm1319 = vcmp.lt.f32.partialorder %v1318, 0.0004427343
    %v1320 = vsel %vm1319, %v1317, %v1314
    %v1321 = vadd.f32 %v401, 1.0
    %v1322 = vlog2.pop %v1321
    %v1323 = vmul.f32 %v1322, 0.6931472
    %v1324 = vmul.f32 -0.5, %v401
    %v1325 = vadd.f32 %v1324, 1.0
    %v1326 = vmul.f32 %v1325, %v401
    %v1327 = vand.u32 2147483647, %v401
    %vm1328 = vcmp.lt.f32.partialorder %v1327, 0.0004427343
    %v1329 = vsel %vm1328, %v1326, %v1323
    %v1330 = vadd.f32 %v403, 1.0
    %v1331 = vlog2.pop %v1330
    %v1332 = vmul.f32 %v1331, 0.6931472
    %v1333 = vmul.f32 -0.5, %v403
    %v1334 = vadd.f32 %v1333, 1.0
    %v1335 = vmul.f32 %v1334, %v403
    %v1336 = vand.u32 2147483647, %v403
    %vm1337 = vcmp.lt.f32.partialorder %v1336, 0.0004427343
    %v1338 = vsel %vm1337, %v1335, %v1332
    %v1339 = vadd.f32 %v405, 1.0
    %v1340 = vlog2.pop %v1339
    %v1341 = vmul.f32 %v1340, 0.6931472
    %v1342 = vmul.f32 -0.5, %v405
    %v1343 = vadd.f32 %v1342, 1.0
    %v1344 = vmul.f32 %v1343, %v405
    %v1345 = vand.u32 2147483647, %v405
    %vm1346 = vcmp.lt.f32.partialorder %v1345, 0.0004427343
    %v1347 = vsel %vm1346, %v1344, %v1341
    %v1348 = vadd.f32 %v407, 1.0
    %v1349 = vlog2.pop %v1348
    %v1350 = vmul.f32 %v1349, 0.6931472
    %v1351 = vmul.f32 -0.5, %v407
    %v1352 = vadd.f32 %v1351, 1.0
    %v1353 = vmul.f32 %v1352, %v407
    %v1354 = vand.u32 2147483647, %v407
    %vm1355 = vcmp.lt.f32.partialorder %v1354, 0.0004427343
    %v1356 = vsel %vm1355, %v1353, %v1350
    %v1357 = vadd.f32 %v409, 1.0
    %v1358 = vlog2.pop %v1357
    %v1359 = vmul.f32 %v1358, 0.6931472
    %v1360 = vmul.f32 -0.5, %v409
    %v1361 = vadd.f32 %v1360, 1.0
    %v1362 = vmul.f32 %v1361, %v409
    %v1363 = vand.u32 2147483647, %v409
    %vm1364 = vcmp.lt.f32.partialorder %v1363, 0.0004427343
    %v1365 = vsel %vm1364, %v1362, %v1359
    %v1366 = vadd.f32 %v411, 1.0
    %v1367 = vlog2.pop %v1366
    %v1368 = vmul.f32 %v1367, 0.6931472
    %v1369 = vmul.f32 -0.5, %v411
    %v1370 = vadd.f32 %v1369, 1.0
    %v1371 = vmul.f32 %v1370, %v411
    %v1372 = vand.u32 2147483647, %v411
    %vm1373 = vcmp.lt.f32.partialorder %v1372, 0.0004427343
    %v1374 = vsel %vm1373, %v1371, %v1368
    %v1375 = vadd.f32 %v413, 1.0
    %v1376 = vlog2.pop %v1375
    %v1377 = vmul.f32 %v1376, 0.6931472
    %v1378 = vmul.f32 -0.5, %v413
    %v1379 = vadd.f32 %v1378, 1.0
    %v1380 = vmul.f32 %v1379, %v413
    %v1381 = vand.u32 2147483647, %v413
    %vm1382 = vcmp.lt.f32.partialorder %v1381, 0.0004427343
    %v1383 = vsel %vm1382, %v1380, %v1377
    %v1384 = vadd.f32 %v415, 1.0
    %v1385 = vlog2.pop %v1384
    %v1386 = vmul.f32 %v1385, 0.6931472
    %v1387 = vmul.f32 -0.5, %v415
    %v1388 = vadd.f32 %v1387, 1.0
    %v1389 = vmul.f32 %v1388, %v415
    %v1390 = vand.u32 2147483647, %v415
    %vm1391 = vcmp.lt.f32.partialorder %v1390, 0.0004427343
    %v1392 = vsel %vm1391, %v1389, %v1386
    %v1393 = vadd.f32 %v417, 1.0
    %v1394 = vlog2.pop %v1393
    %v1395 = vmul.f32 %v1394, 0.6931472
    %v1396 = vmul.f32 -0.5, %v417
    %v1397 = vadd.f32 %v1396, 1.0
    %v1398 = vmul.f32 %v1397, %v417
    %v1399 = vand.u32 2147483647, %v417
    %vm1400 = vcmp.lt.f32.partialorder %v1399, 0.0004427343
    %v1401 = vsel %vm1400, %v1398, %v1395
    %v1402 = vadd.f32 %v419, 1.0
    %v1403 = vlog2.pop %v1402
    %v1404 = vmul.f32 %v1403, 0.6931472
    %v1405 = vmul.f32 -0.5, %v419
    %v1406 = vadd.f32 %v1405, 1.0
    %v1407 = vmul.f32 %v1406, %v419
    %v1408 = vand.u32 2147483647, %v419
    %vm1409 = vcmp.lt.f32.partialorder %v1408, 0.0004427343
    %v1410 = vsel %vm1409, %v1407, %v1404
    %v1411 = vadd.f32 %v421, 1.0
    %v1412 = vlog2.pop %v1411
    %v1413 = vmul.f32 %v1412, 0.6931472
    %v1414 = vmul.f32 -0.5, %v421
    %v1415 = vadd.f32 %v1414, 1.0
    %v1416 = vmul.f32 %v1415, %v421
    %v1417 = vand.u32 2147483647, %v421
    %vm1418 = vcmp.lt.f32.partialorder %v1417, 0.0004427343
    %v1419 = vsel %vm1418, %v1416, %v1413
    %v1420 = vadd.f32 %v423, 1.0
    %v1421 = vlog2.pop %v1420
    %v1422 = vmul.f32 %v1421, 0.6931472
    %v1423 = vmul.f32 -0.5, %v423
    %v1424 = vadd.f32 %v1423, 1.0
    %v1425 = vmul.f32 %v1424, %v423
    %v1426 = vand.u32 2147483647, %v423
    %vm1427 = vcmp.lt.f32.partialorder %v1426, 0.0004427343
    %v1428 = vsel %vm1427, %v1425, %v1422
    %v1429 = vadd.f32 %v425, 1.0
    %v1430 = vlog2.pop %v1429
    %v1431 = vmul.f32 %v1430, 0.6931472
    %v1432 = vmul.f32 -0.5, %v425
    %v1433 = vadd.f32 %v1432, 1.0
    %v1434 = vmul.f32 %v1433, %v425
    %v1435 = vand.u32 2147483647, %v425
    %vm1436 = vcmp.lt.f32.partialorder %v1435, 0.0004427343
    %v1437 = vsel %vm1436, %v1434, %v1431
    %v1438 = vadd.f32 %v427, 1.0
    %v1439 = vlog2.pop %v1438
    %v1440 = vmul.f32 %v1439, 0.6931472
    %v1441 = vmul.f32 -0.5, %v427
    %v1442 = vadd.f32 %v1441, 1.0
    %v1443 = vmul.f32 %v1442, %v427
    %v1444 = vand.u32 2147483647, %v427
    %vm1445 = vcmp.lt.f32.partialorder %v1444, 0.0004427343
    %v1446 = vsel %vm1445, %v1443, %v1440
    %v1447 = vadd.f32 %v429, 1.0
    %v1448 = vlog2.pop %v1447
    %v1449 = vmul.f32 %v1448, 0.6931472
    %v1450 = vmul.f32 -0.5, %v429
    %v1451 = vadd.f32 %v1450, 1.0
    %v1452 = vmul.f32 %v1451, %v429
    %v1453 = vand.u32 2147483647, %v429
    %vm1454 = vcmp.lt.f32.partialorder %v1453, 0.0004427343
    %v1455 = vsel %vm1454, %v1452, %v1449
    %v1456 = vadd.f32 %v431, 1.0
    %v1457 = vlog2.pop %v1456
    %v1458 = vmul.f32 %v1457, 0.6931472
    %v1459 = vmul.f32 -0.5, %v431
    %v1460 = vadd.f32 %v1459, 1.0
    %v1461 = vmul.f32 %v1460, %v431
    %v1462 = vand.u32 2147483647, %v431
    %vm1463 = vcmp.lt.f32.partialorder %v1462, 0.0004427343
    %v1464 = vsel %vm1463, %v1461, %v1458
    %v1465 = vadd.f32 %v433, 1.0
    %v1466 = vlog2.pop %v1465
    %v1467 = vmul.f32 %v1466, 0.6931472
    %v1468 = vmul.f32 -0.5, %v433
    %v1469 = vadd.f32 %v1468, 1.0
    %v1470 = vmul.f32 %v1469, %v433
    %v1471 = vand.u32 2147483647, %v433
    %vm1472 = vcmp.lt.f32.partialorder %v1471, 0.0004427343
    %v1473 = vsel %vm1472, %v1470, %v1467
    %v1474 = vadd.f32 %v435, 1.0
    %v1475 = vlog2.pop %v1474
    %v1476 = vmul.f32 %v1475, 0.6931472
    %v1477 = vmul.f32 -0.5, %v435
    %v1478 = vadd.f32 %v1477, 1.0
    %v1479 = vmul.f32 %v1478, %v435
    %v1480 = vand.u32 2147483647, %v435
    %vm1481 = vcmp.lt.f32.partialorder %v1480, 0.0004427343
    %v1482 = vsel %vm1481, %v1479, %v1476
    %v1483 = vadd.f32 %v437, 1.0
    %v1484 = vlog2.pop %v1483
    %v1485 = vmul.f32 %v1484, 0.6931472
    %v1486 = vmul.f32 -0.5, %v437
    %v1487 = vadd.f32 %v1486, 1.0
    %v1488 = vmul.f32 %v1487, %v437
    %v1489 = vand.u32 2147483647, %v437
    %vm1490 = vcmp.lt.f32.partialorder %v1489, 0.0004427343
    %v1491 = vsel %vm1490, %v1488, %v1485
    %v1492 = vadd.f32 %v439, 1.0
    %v1493 = vlog2.pop %v1492
    %v1494 = vmul.f32 %v1493, 0.6931472
    %v1495 = vmul.f32 -0.5, %v439
    %v1496 = vadd.f32 %v1495, 1.0
    %v1497 = vmul.f32 %v1496, %v439
    %v1498 = vand.u32 2147483647, %v439
    %vm1499 = vcmp.lt.f32.partialorder %v1498, 0.0004427343
    %v1500 = vsel %vm1499, %v1497, %v1494
    %v1501 = vadd.f32 %v441, 1.0
    %v1502 = vlog2.pop %v1501
    %v1503 = vmul.f32 %v1502, 0.6931472
    %v1504 = vmul.f32 -0.5, %v441
    %v1505 = vadd.f32 %v1504, 1.0
    %v1506 = vmul.f32 %v1505, %v441
    %v1507 = vand.u32 2147483647, %v441
    %vm1508 = vcmp.lt.f32.partialorder %v1507, 0.0004427343
    %v1509 = vsel %vm1508, %v1506, %v1503
    %v1510 = vadd.f32 %v443, 1.0
    %v1511 = vlog2.pop %v1510
    %v1512 = vmul.f32 %v1511, 0.6931472
    %v1513 = vmul.f32 -0.5, %v443
    %v1514 = vadd.f32 %v1513, 1.0
    %v1515 = vmul.f32 %v1514, %v443
    %v1516 = vand.u32 2147483647, %v443
    %vm1517 = vcmp.lt.f32.partialorder %v1516, 0.0004427343
    %v1518 = vsel %vm1517, %v1515, %v1512
    %v1519 = vadd.f32 %v445, 1.0
    %v1520 = vlog2.pop %v1519
    %v1521 = vmul.f32 %v1520, 0.6931472
    %v1522 = vmul.f32 -0.5, %v445
    %v1523 = vadd.f32 %v1522, 1.0
    %v1524 = vmul.f32 %v1523, %v445
    %v1525 = vand.u32 2147483647, %v445
    %vm1526 = vcmp.lt.f32.partialorder %v1525, 0.0004427343
    %v1527 = vsel %vm1526, %v1524, %v1521
    %v1528 = vadd.f32 %v447, 1.0
    %v1529 = vlog2.pop %v1528
    %v1530 = vmul.f32 %v1529, 0.6931472
    %v1531 = vmul.f32 -0.5, %v447
    %v1532 = vadd.f32 %v1531, 1.0
    %v1533 = vmul.f32 %v1532, %v447
    %v1534 = vand.u32 2147483647, %v447
    %vm1535 = vcmp.lt.f32.partialorder %v1534, 0.0004427343
    %v1536 = vsel %vm1535, %v1533, %v1530
    %v1537 = vadd.f32 %v449, 1.0
    %v1538 = vlog2.pop %v1537
    %v1539 = vmul.f32 %v1538, 0.6931472
    %v1540 = vmul.f32 -0.5, %v449
    %v1541 = vadd.f32 %v1540, 1.0
    %v1542 = vmul.f32 %v1541, %v449
    %v1543 = vand.u32 2147483647, %v449
    %vm1544 = vcmp.lt.f32.partialorder %v1543, 0.0004427343
    %v1545 = vsel %vm1544, %v1542, %v1539
    %v1546 = vadd.f32 %v451, 1.0
    %v1547 = vlog2.pop %v1546
    %v1548 = vmul.f32 %v1547, 0.6931472
    %v1549 = vmul.f32 -0.5, %v451
    %v1550 = vadd.f32 %v1549, 1.0
    %v1551 = vmul.f32 %v1550, %v451
    %v1552 = vand.u32 2147483647, %v451
    %vm1553 = vcmp.lt.f32.partialorder %v1552, 0.0004427343
    %v1554 = vsel %vm1553, %v1551, %v1548
    %v1555 = vadd.f32 %v453, 1.0
    %v1556 = vlog2.pop %v1555
    %v1557 = vmul.f32 %v1556, 0.6931472
    %v1558 = vmul.f32 -0.5, %v453
    %v1559 = vadd.f32 %v1558, 1.0
    %v1560 = vmul.f32 %v1559, %v453
    %v1561 = vand.u32 2147483647, %v453
    %vm1562 = vcmp.lt.f32.partialorder %v1561, 0.0004427343
    %v1563 = vsel %vm1562, %v1560, %v1557
    %v1564 = vadd.f32 %v455, 1.0
    %v1565 = vlog2.pop %v1564
    %v1566 = vmul.f32 %v1565, 0.6931472
    %v1567 = vmul.f32 -0.5, %v455
    %v1568 = vadd.f32 %v1567, 1.0
    %v1569 = vmul.f32 %v1568, %v455
    %v1570 = vand.u32 2147483647, %v455
    %vm1571 = vcmp.lt.f32.partialorder %v1570, 0.0004427343
    %v1572 = vsel %vm1571, %v1569, %v1566
    %v1573 = vadd.f32 %v457, 1.0
    %v1574 = vlog2.pop %v1573
    %v1575 = vmul.f32 %v1574, 0.6931472
    %v1576 = vmul.f32 -0.5, %v457
    %v1577 = vadd.f32 %v1576, 1.0
    %v1578 = vmul.f32 %v1577, %v457
    %v1579 = vand.u32 2147483647, %v457
    %vm1580 = vcmp.lt.f32.partialorder %v1579, 0.0004427343
    %v1581 = vsel %vm1580, %v1578, %v1575
    %v1582 = vadd.f32 %v459, 1.0
    %v1583 = vlog2.pop %v1582
    %v1584 = vmul.f32 %v1583, 0.6931472
    %v1585 = vmul.f32 -0.5, %v459
    %v1586 = vadd.f32 %v1585, 1.0
    %v1587 = vmul.f32 %v1586, %v459
    %v1588 = vand.u32 2147483647, %v459
    %vm1589 = vcmp.lt.f32.partialorder %v1588, 0.0004427343
    %v1590 = vsel %vm1589, %v1587, %v1584
    %v1591 = vadd.f32 %v461, 1.0
    %v1592 = vlog2.pop %v1591
    %v1593 = vmul.f32 %v1592, 0.6931472
    %v1594 = vmul.f32 -0.5, %v461
    %v1595 = vadd.f32 %v1594, 1.0
    %v1596 = vmul.f32 %v1595, %v461
    %v1597 = vand.u32 2147483647, %v461
    %vm1598 = vcmp.lt.f32.partialorder %v1597, 0.0004427343
    %v1599 = vsel %vm1598, %v1596, %v1593
    %v1600 = vadd.f32 %v463, 1.0
    %v1601 = vlog2.pop %v1600
    %v1602 = vmul.f32 %v1601, 0.6931472
    %v1603 = vmul.f32 -0.5, %v463
    %v1604 = vadd.f32 %v1603, 1.0
    %v1605 = vmul.f32 %v1604, %v463
    %v1606 = vand.u32 2147483647, %v463
    %vm1607 = vcmp.lt.f32.partialorder %v1606, 0.0004427343
    %v1608 = vsel %vm1607, %v1605, %v1602
    %v1609 = vadd.f32 %v465, 1.0
    %v1610 = vlog2.pop %v1609
    %v1611 = vmul.f32 %v1610, 0.6931472
    %v1612 = vmul.f32 -0.5, %v465
    %v1613 = vadd.f32 %v1612, 1.0
    %v1614 = vmul.f32 %v1613, %v465
    %v1615 = vand.u32 2147483647, %v465
    %vm1616 = vcmp.lt.f32.partialorder %v1615, 0.0004427343
    %v1617 = vsel %vm1616, %v1614, %v1611
    %v1618 = vadd.f32 %v978, %v1050
    %v1619 = vadd.f32 %v979, %v1059
    %v1620 = vadd.f32 %v980, %v1068
    %v1621 = vadd.f32 %v981, %v1077
    %v1622 = vadd.f32 %v982, %v1086
    %v1623 = vadd.f32 %v983, %v1095
    %v1624 = vadd.f32 %v984, %v1104
    %v1625 = vadd.f32 %v985, %v1113
    %v1626 = vadd.f32 %v986, %v1122
    %v1627 = vadd.f32 %v987, %v1131
    %v1628 = vadd.f32 %v988, %v1140
    %v1629 = vadd.f32 %v989, %v1149
    %v1630 = vadd.f32 %v990, %v1158
    %v1631 = vadd.f32 %v991, %v1167
    %v1632 = vadd.f32 %v992, %v1176
    %v1633 = vadd.f32 %v993, %v1185
    %v1634 = vadd.f32 %v994, %v1194
    %v1635 = vadd.f32 %v995, %v1203
    %v1636 = vadd.f32 %v996, %v1212
    %v1637 = vadd.f32 %v997, %v1221
    %v1638 = vadd.f32 %v998, %v1230
    %v1639 = vadd.f32 %v999, %v1239
    %v1640 = vadd.f32 %v1000, %v1248
    %v1641 = vadd.f32 %v1001, %v1257
    %v1642 = vadd.f32 %v1002, %v1266
    %v1643 = vadd.f32 %v1003, %v1275
    %v1644 = vadd.f32 %v1004, %v1284
    %v1645 = vadd.f32 %v1005, %v1293
    %v1646 = vadd.f32 %v1006, %v1302
    %v1647 = vadd.f32 %v1007, %v1311
    %v1648 = vadd.f32 %v1008, %v1320
    %v1649 = vadd.f32 %v1009, %v1329
    %v1650 = vadd.f32 %v1010, %v1338
    %v1651 = vadd.f32 %v1011, %v1347
    %v1652 = vadd.f32 %v1012, %v1356
    %v1653 = vadd.f32 %v1013, %v1365
    %v1654 = vadd.f32 %v1014, %v1374
    %v1655 = vadd.f32 %v1015, %v1383
    %v1656 = vadd.f32 %v1016, %v1392
    %v1657 = vadd.f32 %v1017, %v1401
    %v1658 = vadd.f32 %v1018, %v1410
    %v1659 = vadd.f32 %v1019, %v1419
    %v1660 = vadd.f32 %v1020, %v1428
    %v1661 = vadd.f32 %v1021, %v1437
    %v1662 = vadd.f32 %v1022, %v1446
    %v1663 = vadd.f32 %v1023, %v1455
    %v1664 = vadd.f32 %v1024, %v1464
    %v1665 = vadd.f32 %v1025, %v1473
    %v1666 = vadd.f32 %v1026, %v1482
    %v1667 = vadd.f32 %v1027, %v1491
    %v1668 = vadd.f32 %v1028, %v1500
    %v1669 = vadd.f32 %v1029, %v1509
    %v1670 = vadd.f32 %v1030, %v1518
    %v1671 = vadd.f32 %v1031, %v1527
    %v1672 = vadd.f32 %v1032, %v1536
    %v1673 = vadd.f32 %v1033, %v1545
    %v1674 = vadd.f32 %v1034, %v1554
    %v1675 = vadd.f32 %v1035, %v1563
    %v1676 = vadd.f32 %v1036, %v1572
    %v1677 = vadd.f32 %v1037, %v1581
    %v1678 = vadd.f32 %v1038, %v1590
    %v1679 = vadd.f32 %v1039, %v1599
    %v1680 = vadd.f32 %v1040, %v1608
    %v1681 = vadd.f32 %v1041, %v1617
    %v1682 = vmul.f32 %v786, 2.0
    %v1683 = vmul.f32 %v787, 2.0
    %v1684 = vmul.f32 %v788, 2.0
    %v1685 = vmul.f32 %v789, 2.0
    %v1686 = vmul.f32 %v790, 2.0
    %v1687 = vmul.f32 %v791, 2.0
    %v1688 = vmul.f32 %v792, 2.0
    %v1689 = vmul.f32 %v793, 2.0
    %v1690 = vmul.f32 %v794, 2.0
    %v1691 = vmul.f32 %v795, 2.0
    %v1692 = vmul.f32 %v796, 2.0
    %v1693 = vmul.f32 %v797, 2.0
    %v1694 = vmul.f32 %v798, 2.0
    %v1695 = vmul.f32 %v799, 2.0
    %v1696 = vmul.f32 %v800, 2.0
    %v1697 = vmul.f32 %v801, 2.0
    %v1698 = vmul.f32 %v802, 2.0
    %v1699 = vmul.f32 %v803, 2.0
    %v1700 = vmul.f32 %v804, 2.0
    %v1701 = vmul.f32 %v805, 2.0
    %v1702 = vmul.f32 %v806, 2.0
    %v1703 = vmul.f32 %v807, 2.0
    %v1704 = vmul.f32 %v808, 2.0
    %v1705 = vmul.f32 %v809, 2.0
    %v1706 = vmul.f32 %v810, 2.0
    %v1707 = vmul.f32 %v811, 2.0
    %v1708 = vmul.f32 %v812, 2.0
    %v1709 = vmul.f32 %v813, 2.0
    %v1710 = vmul.f32 %v814, 2.0
    %v1711 = vmul.f32 %v815, 2.0
    %v1712 = vmul.f32 %v816, 2.0
    %v1713 = vmul.f32 %v817, 2.0
    %v1714 = vmul.f32 %v818, 2.0
    %v1715 = vmul.f32 %v819, 2.0
    %v1716 = vmul.f32 %v820, 2.0
    %v1717 = vmul.f32 %v821, 2.0
    %v1718 = vmul.f32 %v822, 2.0
    %v1719 = vmul.f32 %v823, 2.0
    %v1720 = vmul.f32 %v824, 2.0
    %v1721 = vmul.f32 %v825, 2.0
    %v1722 = vmul.f32 %v826, 2.0
    %v1723 = vmul.f32 %v827, 2.0
    %v1724 = vmul.f32 %v828, 2.0
    %v1725 = vmul.f32 %v829, 2.0
    %v1726 = vmul.f32 %v830, 2.0
    %v1727 = vmul.f32 %v831, 2.0
    %v1728 = vmul.f32 %v832, 2.0
    %v1729 = vmul.f32 %v833, 2.0
    %v1730 = vmul.f32 %v834, 2.0
    %v1731 = vmul.f32 %v835, 2.0
    %v1732 = vmul.f32 %v836, 2.0
    %v1733 = vmul.f32 %v837, 2.0
    %v1734 = vmul.f32 %v838, 2.0
    %v1735 = vmul.f32 %v839, 2.0
    %v1736 = vmul.f32 %v840, 2.0
    %v1737 = vmul.f32 %v841, 2.0
    %v1738 = vmul.f32 %v842, 2.0
    %v1739 = vmul.f32 %v843, 2.0
    %v1740 = vmul.f32 %v844, 2.0
    %v1741 = vmul.f32 %v845, 2.0
    %v1742 = vmul.f32 %v846, 2.0
    %v1743 = vmul.f32 %v847, 2.0
    %v1744 = vmul.f32 %v848, 2.0
    %v1745 = vmul.f32 %v849, 2.0
    %v1746 = vsub.f32 1.0, %v1682
    %v1747 = vsub.f32 1.0, %v1683
    %v1748 = vsub.f32 1.0, %v1684
    %v1749 = vsub.f32 1.0, %v1685
    %v1750 = vsub.f32 1.0, %v1686
    %v1751 = vsub.f32 1.0, %v1687
    %v1752 = vsub.f32 1.0, %v1688
    %v1753 = vsub.f32 1.0, %v1689
    %v1754 = vsub.f32 1.0, %v1690
    %v1755 = vsub.f32 1.0, %v1691
    %v1756 = vsub.f32 1.0, %v1692
    %v1757 = vsub.f32 1.0, %v1693
    %v1758 = vsub.f32 1.0, %v1694
    %v1759 = vsub.f32 1.0, %v1695
    %v1760 = vsub.f32 1.0, %v1696
    %v1761 = vsub.f32 1.0, %v1697
    %v1762 = vsub.f32 1.0, %v1698
    %v1763 = vsub.f32 1.0, %v1699
    %v1764 = vsub.f32 1.0, %v1700
    %v1765 = vsub.f32 1.0, %v1701
    %v1766 = vsub.f32 1.0, %v1702
    %v1767 = vsub.f32 1.0, %v1703
    %v1768 = vsub.f32 1.0, %v1704
    %v1769 = vsub.f32 1.0, %v1705
    %v1770 = vsub.f32 1.0, %v1706
    %v1771 = vsub.f32 1.0, %v1707
    %v1772 = vsub.f32 1.0, %v1708
    %v1773 = vsub.f32 1.0, %v1709
    %v1774 = vsub.f32 1.0, %v1710
    %v1775 = vsub.f32 1.0, %v1711
    %v1776 = vsub.f32 1.0, %v1712
    %v1777 = vsub.f32 1.0, %v1713
    %v1778 = vsub.f32 1.0, %v1714
    %v1779 = vsub.f32 1.0, %v1715
    %v1780 = vsub.f32 1.0, %v1716
    %v1781 = vsub.f32 1.0, %v1717
    %v1782 = vsub.f32 1.0, %v1718
    %v1783 = vsub.f32 1.0, %v1719
    %v1784 = vsub.f32 1.0, %v1720
    %v1785 = vsub.f32 1.0, %v1721
    %v1786 = vsub.f32 1.0, %v1722
    %v1787 = vsub.f32 1.0, %v1723
    %v1788 = vsub.f32 1.0, %v1724
    %v1789 = vsub.f32 1.0, %v1725
    %v1790 = vsub.f32 1.0, %v1726
    %v1791 = vsub.f32 1.0, %v1727
    %v1792 = vsub.f32 1.0, %v1728
    %v1793 = vsub.f32 1.0, %v1729
    %v1794 = vsub.f32 1.0, %v1730
    %v1795 = vsub.f32 1.0, %v1731
    %v1796 = vsub.f32 1.0, %v1732
    %v1797 = vsub.f32 1.0, %v1733
    %v1798 = vsub.f32 1.0, %v1734
    %v1799 = vsub.f32 1.0, %v1735
    %v1800 = vsub.f32 1.0, %v1736
    %v1801 = vsub.f32 1.0, %v1737
    %v1802 = vsub.f32 1.0, %v1738
    %v1803 = vsub.f32 1.0, %v1739
    %v1804 = vsub.f32 1.0, %v1740
    %v1805 = vsub.f32 1.0, %v1741
    %v1806 = vsub.f32 1.0, %v1742
    %v1807 = vsub.f32 1.0, %v1743
    %v1808 = vsub.f32 1.0, %v1744
    %v1809 = vsub.f32 1.0, %v1745
    %v1810 = vmul.f32 %v82, %v1746
    %v1811 = vmul.f32 %v83, %v1747
    %v1812 = vmul.f32 %v84, %v1748
    %v1813 = vmul.f32 %v85, %v1749
    %v1814 = vmul.f32 %v86, %v1750
    %v1815 = vmul.f32 %v87, %v1751
    %v1816 = vmul.f32 %v88, %v1752
    %v1817 = vmul.f32 %v89, %v1753
    %v1818 = vmul.f32 %v90, %v1754
    %v1819 = vmul.f32 %v91, %v1755
    %v1820 = vmul.f32 %v92, %v1756
    %v1821 = vmul.f32 %v93, %v1757
    %v1822 = vmul.f32 %v94, %v1758
    %v1823 = vmul.f32 %v95, %v1759
    %v1824 = vmul.f32 %v96, %v1760
    %v1825 = vmul.f32 %v97, %v1761
    %v1826 = vmul.f32 %v98, %v1762
    %v1827 = vmul.f32 %v99, %v1763
    %v1828 = vmul.f32 %v100, %v1764
    %v1829 = vmul.f32 %v101, %v1765
    %v1830 = vmul.f32 %v102, %v1766
    %v1831 = vmul.f32 %v103, %v1767
    %v1832 = vmul.f32 %v104, %v1768
    %v1833 = vmul.f32 %v105, %v1769
    %v1834 = vmul.f32 %v106, %v1770
    %v1835 = vmul.f32 %v107, %v1771
    %v1836 = vmul.f32 %v108, %v1772
    %v1837 = vmul.f32 %v109, %v1773
    %v1838 = vmul.f32 %v110, %v1774
    %v1839 = vmul.f32 %v111, %v1775
    %v1840 = vmul.f32 %v112, %v1776
    %v1841 = vmul.f32 %v113, %v1777
    %v1842 = vmul.f32 %v114, %v1778
    %v1843 = vmul.f32 %v115, %v1779
    %v1844 = vmul.f32 %v116, %v1780
    %v1845 = vmul.f32 %v117, %v1781
    %v1846 = vmul.f32 %v118, %v1782
    %v1847 = vmul.f32 %v119, %v1783
    %v1848 = vmul.f32 %v120, %v1784
    %v1849 = vmul.f32 %v121, %v1785
    %v1850 = vmul.f32 %v122, %v1786
    %v1851 = vmul.f32 %v123, %v1787
    %v1852 = vmul.f32 %v124, %v1788
    %v1853 = vmul.f32 %v125, %v1789
    %v1854 = vmul.f32 %v126, %v1790
    %v1855 = vmul.f32 %v127, %v1791
    %v1856 = vmul.f32 %v128, %v1792
    %v1857 = vmul.f32 %v129, %v1793
    %v1858 = vmul.f32 %v130, %v1794
    %v1859 = vmul.f32 %v131, %v1795
    %v1860 = vmul.f32 %v132, %v1796
    %v1861 = vmul.f32 %v133, %v1797
    %v1862 = vmul.f32 %v134, %v1798
    %v1863 = vmul.f32 %v135, %v1799
    %v1864 = vmul.f32 %v136, %v1800
    %v1865 = vmul.f32 %v137, %v1801
    %v1866 = vmul.f32 %v138, %v1802
    %v1867 = vmul.f32 %v139, %v1803
    %v1868 = vmul.f32 %v140, %v1804
    %v1869 = vmul.f32 %v141, %v1805
    %v1870 = vmul.f32 %v142, %v1806
    %v1871 = vmul.f32 %v143, %v1807
    %v1872 = vmul.f32 %v144, %v1808
    %v1873 = vmul.f32 %v145, %v1809
    %v1874 = vadd.f32 %v786, %v1810
    %v1875 = vadd.f32 %v787, %v1811
    %v1876 = vadd.f32 %v788, %v1812
    %v1877 = vadd.f32 %v789, %v1813
    %v1878 = vadd.f32 %v790, %v1814
    %v1879 = vadd.f32 %v791, %v1815
    %v1880 = vadd.f32 %v792, %v1816
    %v1881 = vadd.f32 %v793, %v1817
    %v1882 = vadd.f32 %v794, %v1818
    %v1883 = vadd.f32 %v795, %v1819
    %v1884 = vadd.f32 %v796, %v1820
    %v1885 = vadd.f32 %v797, %v1821
    %v1886 = vadd.f32 %v798, %v1822
    %v1887 = vadd.f32 %v799, %v1823
    %v1888 = vadd.f32 %v800, %v1824
    %v1889 = vadd.f32 %v801, %v1825
    %v1890 = vadd.f32 %v802, %v1826
    %v1891 = vadd.f32 %v803, %v1827
    %v1892 = vadd.f32 %v804, %v1828
    %v1893 = vadd.f32 %v805, %v1829
    %v1894 = vadd.f32 %v806, %v1830
    %v1895 = vadd.f32 %v807, %v1831
    %v1896 = vadd.f32 %v808, %v1832
    %v1897 = vadd.f32 %v809, %v1833
    %v1898 = vadd.f32 %v810, %v1834
    %v1899 = vadd.f32 %v811, %v1835
    %v1900 = vadd.f32 %v812, %v1836
    %v1901 = vadd.f32 %v813, %v1837
    %v1902 = vadd.f32 %v814, %v1838
    %v1903 = vadd.f32 %v815, %v1839
    %v1904 = vadd.f32 %v816, %v1840
    %v1905 = vadd.f32 %v817, %v1841
    %v1906 = vadd.f32 %v818, %v1842
    %v1907 = vadd.f32 %v819, %v1843
    %v1908 = vadd.f32 %v820, %v1844
    %v1909 = vadd.f32 %v821, %v1845
    %v1910 = vadd.f32 %v822, %v1846
    %v1911 = vadd.f32 %v823, %v1847
    %v1912 = vadd.f32 %v824, %v1848
    %v1913 = vadd.f32 %v825, %v1849
    %v1914 = vadd.f32 %v826, %v1850
    %v1915 = vadd.f32 %v827, %v1851
    %v1916 = vadd.f32 %v828, %v1852
    %v1917 = vadd.f32 %v829, %v1853
    %v1918 = vadd.f32 %v830, %v1854
    %v1919 = vadd.f32 %v831, %v1855
    %v1920 = vadd.f32 %v832, %v1856
    %v1921 = vadd.f32 %v833, %v1857
    %v1922 = vadd.f32 %v834, %v1858
    %v1923 = vadd.f32 %v835, %v1859
    %v1924 = vadd.f32 %v836, %v1860
    %v1925 = vadd.f32 %v837, %v1861
    %v1926 = vadd.f32 %v838, %v1862
    %v1927 = vadd.f32 %v839, %v1863
    %v1928 = vadd.f32 %v840, %v1864
    %v1929 = vadd.f32 %v841, %v1865
    %v1930 = vadd.f32 %v842, %v1866
    %v1931 = vadd.f32 %v843, %v1867
    %v1932 = vadd.f32 %v844, %v1868
    %v1933 = vadd.f32 %v845, %v1869
    %v1934 = vadd.f32 %v846, %v1870
    %v1935 = vadd.f32 %v847, %v1871
    %v1936 = vadd.f32 %v848, %v1872
    %v1937 = vadd.f32 %v849, %v1873
    %v1938 = vmul.f32 %v82, -0.5
    %v1939 = vmul.f32 %v83, -0.5
    %v1940 = vmul.f32 %v84, -0.5
    %v1941 = vmul.f32 %v85, -0.5
    %v1942 = vmul.f32 %v86, -0.5
    %v1943 = vmul.f32 %v87, -0.5
    %v1944 = vmul.f32 %v88, -0.5
    %v1945 = vmul.f32 %v89, -0.5
    %v1946 = vmul.f32 %v90, -0.5
    %v1947 = vmul.f32 %v91, -0.5
    %v1948 = vmul.f32 %v92, -0.5
    %v1949 = vmul.f32 %v93, -0.5
    %v1950 = vmul.f32 %v94, -0.5
    %v1951 = vmul.f32 %v95, -0.5
    %v1952 = vmul.f32 %v96, -0.5
    %v1953 = vmul.f32 %v97, -0.5
    %v1954 = vmul.f32 %v98, -0.5
    %v1955 = vmul.f32 %v99, -0.5
    %v1956 = vmul.f32 %v100, -0.5
    %v1957 = vmul.f32 %v101, -0.5
    %v1958 = vmul.f32 %v102, -0.5
    %v1959 = vmul.f32 %v103, -0.5
    %v1960 = vmul.f32 %v104, -0.5
    %v1961 = vmul.f32 %v105, -0.5
    %v1962 = vmul.f32 %v106, -0.5
    %v1963 = vmul.f32 %v107, -0.5
    %v1964 = vmul.f32 %v108, -0.5
    %v1965 = vmul.f32 %v109, -0.5
    %v1966 = vmul.f32 %v110, -0.5
    %v1967 = vmul.f32 %v111, -0.5
    %v1968 = vmul.f32 %v112, -0.5
    %v1969 = vmul.f32 %v113, -0.5
    %v1970 = vmul.f32 %v114, -0.5
    %v1971 = vmul.f32 %v115, -0.5
    %v1972 = vmul.f32 %v116, -0.5
    %v1973 = vmul.f32 %v117, -0.5
    %v1974 = vmul.f32 %v118, -0.5
    %v1975 = vmul.f32 %v119, -0.5
    %v1976 = vmul.f32 %v120, -0.5
    %v1977 = vmul.f32 %v121, -0.5
    %v1978 = vmul.f32 %v122, -0.5
    %v1979 = vmul.f32 %v123, -0.5
    %v1980 = vmul.f32 %v124, -0.5
    %v1981 = vmul.f32 %v125, -0.5
    %v1982 = vmul.f32 %v126, -0.5
    %v1983 = vmul.f32 %v127, -0.5
    %v1984 = vmul.f32 %v128, -0.5
    %v1985 = vmul.f32 %v129, -0.5
    %v1986 = vmul.f32 %v130, -0.5
    %v1987 = vmul.f32 %v131, -0.5
    %v1988 = vmul.f32 %v132, -0.5
    %v1989 = vmul.f32 %v133, -0.5
    %v1990 = vmul.f32 %v134, -0.5
    %v1991 = vmul.f32 %v135, -0.5
    %v1992 = vmul.f32 %v136, -0.5
    %v1993 = vmul.f32 %v137, -0.5
    %v1994 = vmul.f32 %v138, -0.5
    %v1995 = vmul.f32 %v139, -0.5
    %v1996 = vmul.f32 %v140, -0.5
    %v1997 = vmul.f32 %v141, -0.5
    %v1998 = vmul.f32 %v142, -0.5
    %v1999 = vmul.f32 %v143, -0.5
    %v2000 = vmul.f32 %v144, -0.5
    %v2001 = vmul.f32 %v145, -0.5
    %v2002 = vadd.f32 %v1938, 0.75
    %v2003 = vadd.f32 %v1939, 0.75
    %v2004 = vadd.f32 %v1940, 0.75
    %v2005 = vadd.f32 %v1941, 0.75
    %v2006 = vadd.f32 %v1942, 0.75
    %v2007 = vadd.f32 %v1943, 0.75
    %v2008 = vadd.f32 %v1944, 0.75
    %v2009 = vadd.f32 %v1945, 0.75
    %v2010 = vadd.f32 %v1946, 0.75
    %v2011 = vadd.f32 %v1947, 0.75
    %v2012 = vadd.f32 %v1948, 0.75
    %v2013 = vadd.f32 %v1949, 0.75
    %v2014 = vadd.f32 %v1950, 0.75
    %v2015 = vadd.f32 %v1951, 0.75
    %v2016 = vadd.f32 %v1952, 0.75
    %v2017 = vadd.f32 %v1953, 0.75
    %v2018 = vadd.f32 %v1954, 0.75
    %v2019 = vadd.f32 %v1955, 0.75
    %v2020 = vadd.f32 %v1956, 0.75
    %v2021 = vadd.f32 %v1957, 0.75
    %v2022 = vadd.f32 %v1958, 0.75
    %v2023 = vadd.f32 %v1959, 0.75
    %v2024 = vadd.f32 %v1960, 0.75
    %v2025 = vadd.f32 %v1961, 0.75
    %v2026 = vadd.f32 %v1962, 0.75
    %v2027 = vadd.f32 %v1963, 0.75
    %v2028 = vadd.f32 %v1964, 0.75
    %v2029 = vadd.f32 %v1965, 0.75
    %v2030 = vadd.f32 %v1966, 0.75
    %v2031 = vadd.f32 %v1967, 0.75
    %v2032 = vadd.f32 %v1968, 0.75
    %v2033 = vadd.f32 %v1969, 0.75
    %v2034 = vadd.f32 %v1970, 0.75
    %v2035 = vadd.f32 %v1971, 0.75
    %v2036 = vadd.f32 %v1972, 0.75
    %v2037 = vadd.f32 %v1973, 0.75
    %v2038 = vadd.f32 %v1974, 0.75
    %v2039 = vadd.f32 %v1975, 0.75
    %v2040 = vadd.f32 %v1976, 0.75
    %v2041 = vadd.f32 %v1977, 0.75
    %v2042 = vadd.f32 %v1978, 0.75
    %v2043 = vadd.f32 %v1979, 0.75
    %v2044 = vadd.f32 %v1980, 0.75
    %v2045 = vadd.f32 %v1981, 0.75
    %v2046 = vadd.f32 %v1982, 0.75
    %v2047 = vadd.f32 %v1983, 0.75
    %v2048 = vadd.f32 %v1984, 0.75
    %v2049 = vadd.f32 %v1985, 0.75
    %v2050 = vadd.f32 %v1986, 0.75
    %v2051 = vadd.f32 %v1987, 0.75
    %v2052 = vadd.f32 %v1988, 0.75
    %v2053 = vadd.f32 %v1989, 0.75
    %v2054 = vadd.f32 %v1990, 0.75
    %v2055 = vadd.f32 %v1991, 0.75
    %v2056 = vadd.f32 %v1992, 0.75
    %v2057 = vadd.f32 %v1993, 0.75
    %v2058 = vadd.f32 %v1994, 0.75
    %v2059 = vadd.f32 %v1995, 0.75
    %v2060 = vadd.f32 %v1996, 0.75
    %v2061 = vadd.f32 %v1997, 0.75
    %v2062 = vadd.f32 %v1998, 0.75
    %v2063 = vadd.f32 %v1999, 0.75
    %v2064 = vadd.f32 %v2000, 0.75
    %v2065 = vadd.f32 %v2001, 0.75
    %v2066 = vmul.f32 %v2002, %v146
    %v2067 = vmul.f32 %v2003, %v147
    %v2068 = vmul.f32 %v2004, %v148
    %v2069 = vmul.f32 %v2005, %v149
    %v2070 = vmul.f32 %v2006, %v150
    %v2071 = vmul.f32 %v2007, %v151
    %v2072 = vmul.f32 %v2008, %v152
    %v2073 = vmul.f32 %v2009, %v153
    %v2074 = vmul.f32 %v2010, %v154
    %v2075 = vmul.f32 %v2011, %v155
    %v2076 = vmul.f32 %v2012, %v156
    %v2077 = vmul.f32 %v2013, %v157
    %v2078 = vmul.f32 %v2014, %v158
    %v2079 = vmul.f32 %v2015, %v159
    %v2080 = vmul.f32 %v2016, %v160
    %v2081 = vmul.f32 %v2017, %v161
    %v2082 = vmul.f32 %v2018, %v162
    %v2083 = vmul.f32 %v2019, %v163
    %v2084 = vmul.f32 %v2020, %v164
    %v2085 = vmul.f32 %v2021, %v165
    %v2086 = vmul.f32 %v2022, %v166
    %v2087 = vmul.f32 %v2023, %v167
    %v2088 = vmul.f32 %v2024, %v168
    %v2089 = vmul.f32 %v2025, %v169
    %v2090 = vmul.f32 %v2026, %v170
    %v2091 = vmul.f32 %v2027, %v171
    %v2092 = vmul.f32 %v2028, %v172
    %v2093 = vmul.f32 %v2029, %v173
    %v2094 = vmul.f32 %v2030, %v174
    %v2095 = vmul.f32 %v2031, %v175
    %v2096 = vmul.f32 %v2032, %v176
    %v2097 = vmul.f32 %v2033, %v177
    %v2098 = vmul.f32 %v2034, %v178
    %v2099 = vmul.f32 %v2035, %v179
    %v2100 = vmul.f32 %v2036, %v180
    %v2101 = vmul.f32 %v2037, %v181
    %v2102 = vmul.f32 %v2038, %v182
    %v2103 = vmul.f32 %v2039, %v183
    %v2104 = vmul.f32 %v2040, %v184
    %v2105 = vmul.f32 %v2041, %v185
    %v2106 = vmul.f32 %v2042, %v186
    %v2107 = vmul.f32 %v2043, %v187
    %v2108 = vmul.f32 %v2044, %v188
    %v2109 = vmul.f32 %v2045, %v189
    %v2110 = vmul.f32 %v2046, %v190
    %v2111 = vmul.f32 %v2047, %v191
    %v2112 = vmul.f32 %v2048, %v192
    %v2113 = vmul.f32 %v2049, %v193
    %v2114 = vmul.f32 %v2050, %v194
    %v2115 = vmul.f32 %v2051, %v195
    %v2116 = vmul.f32 %v2052, %v196
    %v2117 = vmul.f32 %v2053, %v197
    %v2118 = vmul.f32 %v2054, %v198
    %v2119 = vmul.f32 %v2055, %v199
    %v2120 = vmul.f32 %v2056, %v200
    %v2121 = vmul.f32 %v2057, %v201
    %v2122 = vmul.f32 %v2058, %v202
    %v2123 = vmul.f32 %v2059, %v203
    %v2124 = vmul.f32 %v2060, %v204
    %v2125 = vmul.f32 %v2061, %v205
    %v2126 = vmul.f32 %v2062, %v206
    %v2127 = vmul.f32 %v2063, %v207
    %v2128 = vmul.f32 %v2064, %v208
    %v2129 = vmul.f32 %v2065, %v209
    %v2130 = vmul.f32 %v1874, %v1874
    %v2131 = vmul.f32 %v1875, %v1875
    %v2132 = vmul.f32 %v1876, %v1876
    %v2133 = vmul.f32 %v1877, %v1877
    %v2134 = vmul.f32 %v1878, %v1878
    %v2135 = vmul.f32 %v1879, %v1879
    %v2136 = vmul.f32 %v1880, %v1880
    %v2137 = vmul.f32 %v1881, %v1881
    %v2138 = vmul.f32 %v1882, %v1882
    %v2139 = vmul.f32 %v1883, %v1883
    %v2140 = vmul.f32 %v1884, %v1884
    %v2141 = vmul.f32 %v1885, %v1885
    %v2142 = vmul.f32 %v1886, %v1886
    %v2143 = vmul.f32 %v1887, %v1887
    %v2144 = vmul.f32 %v1888, %v1888
    %v2145 = vmul.f32 %v1889, %v1889
    %v2146 = vmul.f32 %v1890, %v1890
    %v2147 = vmul.f32 %v1891, %v1891
    %v2148 = vmul.f32 %v1892, %v1892
    %v2149 = vmul.f32 %v1893, %v1893
    %v2150 = vmul.f32 %v1894, %v1894
    %v2151 = vmul.f32 %v1895, %v1895
    %v2152 = vmul.f32 %v1896, %v1896
    %v2153 = vmul.f32 %v1897, %v1897
    %v2154 = vmul.f32 %v1898, %v1898
    %v2155 = vmul.f32 %v1899, %v1899
    %v2156 = vmul.f32 %v1900, %v1900
    %v2157 = vmul.f32 %v1901, %v1901
    %v2158 = vmul.f32 %v1902, %v1902
    %v2159 = vmul.f32 %v1903, %v1903
    %v2160 = vmul.f32 %v1904, %v1904
    %v2161 = vmul.f32 %v1905, %v1905
    %v2162 = vmul.f32 %v1906, %v1906
    %v2163 = vmul.f32 %v1907, %v1907
    %v2164 = vmul.f32 %v1908, %v1908
    %v2165 = vmul.f32 %v1909, %v1909
    %v2166 = vmul.f32 %v1910, %v1910
    %v2167 = vmul.f32 %v1911, %v1911
    %v2168 = vmul.f32 %v1912, %v1912
    %v2169 = vmul.f32 %v1913, %v1913
    %v2170 = vmul.f32 %v1914, %v1914
    %v2171 = vmul.f32 %v1915, %v1915
    %v2172 = vmul.f32 %v1916, %v1916
    %v2173 = vmul.f32 %v1917, %v1917
    %v2174 = vmul.f32 %v1918, %v1918
    %v2175 = vmul.f32 %v1919, %v1919
    %v2176 = vmul.f32 %v1920, %v1920
    %v2177 = vmul.f32 %v1921, %v1921
    %v2178 = vmul.f32 %v1922, %v1922
    %v2179 = vmul.f32 %v1923, %v1923
    %v2180 = vmul.f32 %v1924, %v1924
    %v2181 = vmul.f32 %v1925, %v1925
    %v2182 = vmul.f32 %v1926, %v1926
    %v2183 = vmul.f32 %v1927, %v1927
    %v2184 = vmul.f32 %v1928, %v1928
    %v2185 = vmul.f32 %v1929, %v1929
    %v2186 = vmul.f32 %v1930, %v1930
    %v2187 = vmul.f32 %v1931, %v1931
    %v2188 = vmul.f32 %v1932, %v1932
    %v2189 = vmul.f32 %v1933, %v1933
    %v2190 = vmul.f32 %v1934, %v1934
    %v2191 = vmul.f32 %v1935, %v1935
    %v2192 = vmul.f32 %v1936, %v1936
    %v2193 = vmul.f32 %v1937, %v1937
    %v2194 = vmul.f32 %v2066, %v2130
    %v2195 = vmul.f32 %v2067, %v2131
    %v2196 = vmul.f32 %v2068, %v2132
    %v2197 = vmul.f32 %v2069, %v2133
    %v2198 = vmul.f32 %v2070, %v2134
    %v2199 = vmul.f32 %v2071, %v2135
    %v2200 = vmul.f32 %v2072, %v2136
    %v2201 = vmul.f32 %v2073, %v2137
    %v2202 = vmul.f32 %v2074, %v2138
    %v2203 = vmul.f32 %v2075, %v2139
    %v2204 = vmul.f32 %v2076, %v2140
    %v2205 = vmul.f32 %v2077, %v2141
    %v2206 = vmul.f32 %v2078, %v2142
    %v2207 = vmul.f32 %v2079, %v2143
    %v2208 = vmul.f32 %v2080, %v2144
    %v2209 = vmul.f32 %v2081, %v2145
    %v2210 = vmul.f32 %v2082, %v2146
    %v2211 = vmul.f32 %v2083, %v2147
    %v2212 = vmul.f32 %v2084, %v2148
    %v2213 = vmul.f32 %v2085, %v2149
    %v2214 = vmul.f32 %v2086, %v2150
    %v2215 = vmul.f32 %v2087, %v2151
    %v2216 = vmul.f32 %v2088, %v2152
    %v2217 = vmul.f32 %v2089, %v2153
    %v2218 = vmul.f32 %v2090, %v2154
    %v2219 = vmul.f32 %v2091, %v2155
    %v2220 = vmul.f32 %v2092, %v2156
    %v2221 = vmul.f32 %v2093, %v2157
    %v2222 = vmul.f32 %v2094, %v2158
    %v2223 = vmul.f32 %v2095, %v2159
    %v2224 = vmul.f32 %v2096, %v2160
    %v2225 = vmul.f32 %v2097, %v2161
    %v2226 = vmul.f32 %v2098, %v2162
    %v2227 = vmul.f32 %v2099, %v2163
    %v2228 = vmul.f32 %v2100, %v2164
    %v2229 = vmul.f32 %v2101, %v2165
    %v2230 = vmul.f32 %v2102, %v2166
    %v2231 = vmul.f32 %v2103, %v2167
    %v2232 = vmul.f32 %v2104, %v2168
    %v2233 = vmul.f32 %v2105, %v2169
    %v2234 = vmul.f32 %v2106, %v2170
    %v2235 = vmul.f32 %v2107, %v2171
    %v2236 = vmul.f32 %v2108, %v2172
    %v2237 = vmul.f32 %v2109, %v2173
    %v2238 = vmul.f32 %v2110, %v2174
    %v2239 = vmul.f32 %v2111, %v2175
    %v2240 = vmul.f32 %v2112, %v2176
    %v2241 = vmul.f32 %v2113, %v2177
    %v2242 = vmul.f32 %v2114, %v2178
    %v2243 = vmul.f32 %v2115, %v2179
    %v2244 = vmul.f32 %v2116, %v2180
    %v2245 = vmul.f32 %v2117, %v2181
    %v2246 = vmul.f32 %v2118, %v2182
    %v2247 = vmul.f32 %v2119, %v2183
    %v2248 = vmul.f32 %v2120, %v2184
    %v2249 = vmul.f32 %v2121, %v2185
    %v2250 = vmul.f32 %v2122, %v2186
    %v2251 = vmul.f32 %v2123, %v2187
    %v2252 = vmul.f32 %v2124, %v2188
    %v2253 = vmul.f32 %v2125, %v2189
    %v2254 = vmul.f32 %v2126, %v2190
    %v2255 = vmul.f32 %v2127, %v2191
    %v2256 = vmul.f32 %v2128, %v2192
    %v2257 = vmul.f32 %v2129, %v2193
    %v2258 = vmul.f32 %v1618, %v2194
    %v2259 = vmul.f32 %v1619, %v2195
    %v2260 = vmul.f32 %v1620, %v2196
    %v2261 = vmul.f32 %v1621, %v2197
    %v2262 = vmul.f32 %v1622, %v2198
    %v2263 = vmul.f32 %v1623, %v2199
    %v2264 = vmul.f32 %v1624, %v2200
    %v2265 = vmul.f32 %v1625, %v2201
    %v2266 = vmul.f32 %v1626, %v2202
    %v2267 = vmul.f32 %v1627, %v2203
    %v2268 = vmul.f32 %v1628, %v2204
    %v2269 = vmul.f32 %v1629, %v2205
    %v2270 = vmul.f32 %v1630, %v2206
    %v2271 = vmul.f32 %v1631, %v2207
    %v2272 = vmul.f32 %v1632, %v2208
    %v2273 = vmul.f32 %v1633, %v2209
    %v2274 = vmul.f32 %v1634, %v2210
    %v2275 = vmul.f32 %v1635, %v2211
    %v2276 = vmul.f32 %v1636, %v2212
    %v2277 = vmul.f32 %v1637, %v2213
    %v2278 = vmul.f32 %v1638, %v2214
    %v2279 = vmul.f32 %v1639, %v2215
    %v2280 = vmul.f32 %v1640, %v2216
    %v2281 = vmul.f32 %v1641, %v2217
    %v2282 = vmul.f32 %v1642, %v2218
    %v2283 = vmul.f32 %v1643, %v2219
    %v2284 = vmul.f32 %v1644, %v2220
    %v2285 = vmul.f32 %v1645, %v2221
    %v2286 = vmul.f32 %v1646, %v2222
    %v2287 = vmul.f32 %v1647, %v2223
    %v2288 = vmul.f32 %v1648, %v2224
    %v2289 = vmul.f32 %v1649, %v2225
    %v2290 = vmul.f32 %v1650, %v2226
    %v2291 = vmul.f32 %v1651, %v2227
    %v2292 = vmul.f32 %v1652, %v2228
    %v2293 = vmul.f32 %v1653, %v2229
    %v2294 = vmul.f32 %v1654, %v2230
    %v2295 = vmul.f32 %v1655, %v2231
    %v2296 = vmul.f32 %v1656, %v2232
    %v2297 = vmul.f32 %v1657, %v2233
    %v2298 = vmul.f32 %v1658, %v2234
    %v2299 = vmul.f32 %v1659, %v2235
    %v2300 = vmul.f32 %v1660, %v2236
    %v2301 = vmul.f32 %v1661, %v2237
    %v2302 = vmul.f32 %v1662, %v2238
    %v2303 = vmul.f32 %v1663, %v2239
    %v2304 = vmul.f32 %v1664, %v2240
    %v2305 = vmul.f32 %v1665, %v2241
    %v2306 = vmul.f32 %v1666, %v2242
    %v2307 = vmul.f32 %v1667, %v2243
    %v2308 = vmul.f32 %v1668, %v2244
    %v2309 = vmul.f32 %v1669, %v2245
    %v2310 = vmul.f32 %v1670, %v2246
    %v2311 = vmul.f32 %v1671, %v2247
    %v2312 = vmul.f32 %v1672, %v2248
    %v2313 = vmul.f32 %v1673, %v2249
    %v2314 = vmul.f32 %v1674, %v2250
    %v2315 = vmul.f32 %v1675, %v2251
    %v2316 = vmul.f32 %v1676, %v2252
    %v2317 = vmul.f32 %v1677, %v2253
    %v2318 = vmul.f32 %v1678, %v2254
    %v2319 = vmul.f32 %v1679, %v2255
    %v2320 = vmul.f32 %v1680, %v2256
    %v2321 = vmul.f32 %v1681, %v2257
    %vm2322 = vcmask 64512
    %v2323 = vsel %vm2322, %v2258, 0.0
    %v2324 = vsel %vm2322, %v2259, 0.0
    %v2325 = vadd.f32 %v2323, %v2324
    %v2326 = vsel %vm2322, %v2260, 0.0
    %v2327 = vadd.f32 %v2325, %v2326
    %v2328 = vsel %vm2322, %v2261, 0.0
    %v2329 = vadd.f32 %v2327, %v2328
    %v2330 = vsel %vm2322, %v2262, 0.0
    %v2331 = vadd.f32 %v2329, %v2330
    %v2332 = vsel %vm2322, %v2263, 0.0
    %v2333 = vadd.f32 %v2331, %v2332
    %v2334 = vsel %vm2322, %v2264, 0.0
    %v2335 = vadd.f32 %v2333, %v2334
    %v2336 = vsel %vm2322, %v2265, 0.0
    %v2337 = vadd.f32 %v2335, %v2336
    %v2338 = vsel %vm2322, %v2266, 0.0
    %v2339 = vadd.f32 %v2337, %v2338
    %v2340 = vsel %vm2322, %v2267, 0.0
    %v2341 = vadd.f32 %v2339, %v2340
    %v2342 = vsel %vm2322, %v2268, 0.0
    %v2343 = vadd.f32 %v2341, %v2342
    %v2344 = vsel %vm2322, %v2269, 0.0
    %v2345 = vadd.f32 %v2343, %v2344
    %v2346 = vsel %vm2322, %v2270, 0.0
    %v2347 = vadd.f32 %v2345, %v2346
    %v2348 = vsel %vm2322, %v2271, 0.0
    %v2349 = vadd.f32 %v2347, %v2348
    %v2350 = vsel %vm2322, %v2272, 0.0
    %v2351 = vadd.f32 %v2349, %v2350
    %v2352 = vsel %vm2322, %v2273, 0.0
    %v2353 = vadd.f32 %v2351, %v2352
    %v2354 = vsel %vm2322, %v2274, 0.0
    %v2355 = vadd.f32 %v2353, %v2354
    %v2356 = vsel %vm2322, %v2275, 0.0
    %v2357 = vadd.f32 %v2355, %v2356
    %v2358 = vsel %vm2322, %v2276, 0.0
    %v2359 = vadd.f32 %v2357, %v2358
    %v2360 = vsel %vm2322, %v2277, 0.0
    %v2361 = vadd.f32 %v2359, %v2360
    %v2362 = vsel %vm2322, %v2278, 0.0
    %v2363 = vadd.f32 %v2361, %v2362
    %v2364 = vsel %vm2322, %v2279, 0.0
    %v2365 = vadd.f32 %v2363, %v2364
    %v2366 = vsel %vm2322, %v2280, 0.0
    %v2367 = vadd.f32 %v2365, %v2366
    %v2368 = vsel %vm2322, %v2281, 0.0
    %v2369 = vadd.f32 %v2367, %v2368
    %v2370 = vsel %vm2322, %v2282, 0.0
    %v2371 = vadd.f32 %v2369, %v2370
    %v2372 = vsel %vm2322, %v2283, 0.0
    %v2373 = vadd.f32 %v2371, %v2372
    %v2374 = vsel %vm2322, %v2284, 0.0
    %v2375 = vadd.f32 %v2373, %v2374
    %v2376 = vsel %vm2322, %v2285, 0.0
    %v2377 = vadd.f32 %v2375, %v2376
    %v2378 = vsel %vm2322, %v2286, 0.0
    %v2379 = vadd.f32 %v2377, %v2378
    %v2380 = vsel %vm2322, %v2287, 0.0
    %v2381 = vadd.f32 %v2379, %v2380
    %v2382 = vsel %vm2322, %v2288, 0.0
    %v2383 = vadd.f32 %v2381, %v2382
    %v2384 = vsel %vm2322, %v2289, 0.0
    %v2385 = vadd.f32 %v2383, %v2384
    %v2386 = vsel %vm2322, %v2290, 0.0
    %v2387 = vadd.f32 %v2385, %v2386
    %v2388 = vsel %vm2322, %v2291, 0.0
    %v2389 = vadd.f32 %v2387, %v2388
    %v2390 = vsel %vm2322, %v2292, 0.0
    %v2391 = vadd.f32 %v2389, %v2390
    %v2392 = vsel %vm2322, %v2293, 0.0
    %v2393 = vadd.f32 %v2391, %v2392
    %v2394 = vsel %vm2322, %v2294, 0.0
    %v2395 = vadd.f32 %v2393, %v2394
    %v2396 = vsel %vm2322, %v2295, 0.0
    %v2397 = vadd.f32 %v2395, %v2396
    %v2398 = vsel %vm2322, %v2296, 0.0
    %v2399 = vadd.f32 %v2397, %v2398
    %v2400 = vsel %vm2322, %v2297, 0.0
    %v2401 = vadd.f32 %v2399, %v2400
    %v2402 = vsel %vm2322, %v2298, 0.0
    %v2403 = vadd.f32 %v2401, %v2402
    %v2404 = vsel %vm2322, %v2299, 0.0
    %v2405 = vadd.f32 %v2403, %v2404
    %v2406 = vsel %vm2322, %v2300, 0.0
    %v2407 = vadd.f32 %v2405, %v2406
    %v2408 = vsel %vm2322, %v2301, 0.0
    %v2409 = vadd.f32 %v2407, %v2408
    %v2410 = vsel %vm2322, %v2302, 0.0
    %v2411 = vadd.f32 %v2409, %v2410
    %v2412 = vsel %vm2322, %v2303, 0.0
    %v2413 = vadd.f32 %v2411, %v2412
    %v2414 = vsel %vm2322, %v2304, 0.0
    %v2415 = vadd.f32 %v2413, %v2414
    %v2416 = vsel %vm2322, %v2305, 0.0
    %v2417 = vadd.f32 %v2415, %v2416
    %v2418 = vsel %vm2322, %v2306, 0.0
    %v2419 = vadd.f32 %v2417, %v2418
    %v2420 = vsel %vm2322, %v2307, 0.0
    %v2421 = vadd.f32 %v2419, %v2420
    %v2422 = vsel %vm2322, %v2308, 0.0
    %v2423 = vadd.f32 %v2421, %v2422
    %v2424 = vsel %vm2322, %v2309, 0.0
    %v2425 = vadd.f32 %v2423, %v2424
    %v2426 = vsel %vm2322, %v2310, 0.0
    %v2427 = vadd.f32 %v2425, %v2426
    %v2428 = vsel %vm2322, %v2311, 0.0
    %v2429 = vadd.f32 %v2427, %v2428
    %v2430 = vsel %vm2322, %v2312, 0.0
    %v2431 = vadd.f32 %v2429, %v2430
    %v2432 = vsel %vm2322, %v2313, 0.0
    %v2433 = vadd.f32 %v2431, %v2432
    %v2434 = vsel %vm2322, %v2314, 0.0
    %v2435 = vadd.f32 %v2433, %v2434
    %v2436 = vsel %vm2322, %v2315, 0.0
    %v2437 = vadd.f32 %v2435, %v2436
    %v2438 = vsel %vm2322, %v2316, 0.0
    %v2439 = vadd.f32 %v2437, %v2438
    %v2440 = vsel %vm2322, %v2317, 0.0
    %v2441 = vadd.f32 %v2439, %v2440
    %v2442 = vsel %vm2322, %v2318, 0.0
    %v2443 = vadd.f32 %v2441, %v2442
    %v2444 = vsel %vm2322, %v2319, 0.0
    %v2445 = vadd.f32 %v2443, %v2444
    %v2446 = vsel %vm2322, %v2320, 0.0
    %v2447 = vadd.f32 %v2445, %v2446
    %v2448 = vsel %vm2322, %v2321, 0.0
    %v2449 = vadd.f32 %v2447, %v2448
    %2450 = vadd.xlane.f32.xlu0 %v2449
    %v2451 = vpop.xlane.xlu0 %2450
    %v2452 = vrot.slane %v2451, 4
    %v2453 = vadd.f32 %v2451, %v2452
    %v2454 = vrot.slane %v2453, 2
    %v2455 = vadd.f32 %v2453, %v2454
    %v2456 = vrot.slane %v2455, 1
    %v2457 = vadd.f32 %v2455, %v2456
    %s2458 = vtos %v2457
    %s2459 = scalar_lea.smem [#allocation2], 0
    %2460 = sst [smem:[%s2459]] %s2458
    %vm2461 = vcmp.gt.f32.partialorder %v146, 0.0
    %vm2462 = vcmp.gt.f32.partialorder %v147, 0.0
    %vm2463 = vcmp.gt.f32.partialorder %v148, 0.0
    %vm2464 = vcmp.gt.f32.partialorder %v149, 0.0
    %vm2465 = vcmp.gt.f32.partialorder %v150, 0.0
    %vm2466 = vcmp.gt.f32.partialorder %v151, 0.0
    %vm2467 = vcmp.gt.f32.partialorder %v152, 0.0
    %vm2468 = vcmp.gt.f32.partialorder %v153, 0.0
    %vm2469 = vcmp.gt.f32.partialorder %v154, 0.0
    %vm2470 = vcmp.gt.f32.partialorder %v155, 0.0
    %vm2471 = vcmp.gt.f32.partialorder %v156, 0.0
    %vm2472 = vcmp.gt.f32.partialorder %v157, 0.0
    %vm2473 = vcmp.gt.f32.partialorder %v158, 0.0
    %vm2474 = vcmp.gt.f32.partialorder %v159, 0.0
    %vm2475 = vcmp.gt.f32.partialorder %v160, 0.0
    %vm2476 = vcmp.gt.f32.partialorder %v161, 0.0
    %vm2477 = vcmp.gt.f32.partialorder %v162, 0.0
    %vm2478 = vcmp.gt.f32.partialorder %v163, 0.0
    %vm2479 = vcmp.gt.f32.partialorder %v164, 0.0
    %vm2480 = vcmp.gt.f32.partialorder %v165, 0.0
    %vm2481 = vcmp.gt.f32.partialorder %v166, 0.0
    %vm2482 = vcmp.gt.f32.partialorder %v167, 0.0
    %vm2483 = vcmp.gt.f32.partialorder %v168, 0.0
    %vm2484 = vcmp.gt.f32.partialorder %v169, 0.0
    %vm2485 = vcmp.gt.f32.partialorder %v170, 0.0
    %vm2486 = vcmp.gt.f32.partialorder %v171, 0.0
    %vm2487 = vcmp.gt.f32.partialorder %v172, 0.0
    %vm2488 = vcmp.gt.f32.partialorder %v173, 0.0
    %vm2489 = vcmp.gt.f32.partialorder %v174, 0.0
    %vm2490 = vcmp.gt.f32.partialorder %v175, 0.0
    %vm2491 = vcmp.gt.f32.partialorder %v176, 0.0
    %vm2492 = vcmp.gt.f32.partialorder %v177, 0.0
    %vm2493 = vcmp.gt.f32.partialorder %v178, 0.0
    %vm2494 = vcmp.gt.f32.partialorder %v179, 0.0
    %vm2495 = vcmp.gt.f32.partialorder %v180, 0.0
    %vm2496 = vcmp.gt.f32.partialorder %v181, 0.0
    %vm2497 = vcmp.gt.f32.partialorder %v182, 0.0
    %vm2498 = vcmp.gt.f32.partialorder %v183, 0.0
    %vm2499 = vcmp.gt.f32.partialorder %v184, 0.0
    %vm2500 = vcmp.gt.f32.partialorder %v185, 0.0
    %vm2501 = vcmp.gt.f32.partialorder %v186, 0.0
    %vm2502 = vcmp.gt.f32.partialorder %v187, 0.0
    %vm2503 = vcmp.gt.f32.partialorder %v188, 0.0
    %vm2504 = vcmp.gt.f32.partialorder %v189, 0.0
    %vm2505 = vcmp.gt.f32.partialorder %v190, 0.0
    %vm2506 = vcmp.gt.f32.partialorder %v191, 0.0
    %vm2507 = vcmp.gt.f32.partialorder %v192, 0.0
    %vm2508 = vcmp.gt.f32.partialorder %v193, 0.0
    %vm2509 = vcmp.gt.f32.partialorder %v194, 0.0
    %vm2510 = vcmp.gt.f32.partialorder %v195, 0.0
    %vm2511 = vcmp.gt.f32.partialorder %v196, 0.0
    %vm2512 = vcmp.gt.f32.partialorder %v197, 0.0
    %vm2513 = vcmp.gt.f32.partialorder %v198, 0.0
    %vm2514 = vcmp.gt.f32.partialorder %v199, 0.0
    %vm2515 = vcmp.gt.f32.partialorder %v200, 0.0
    %vm2516 = vcmp.gt.f32.partialorder %v201, 0.0
    %vm2517 = vcmp.gt.f32.partialorder %v202, 0.0
    %vm2518 = vcmp.gt.f32.partialorder %v203, 0.0
    %vm2519 = vcmp.gt.f32.partialorder %v204, 0.0
    %vm2520 = vcmp.gt.f32.partialorder %v205, 0.0
    %vm2521 = vcmp.gt.f32.partialorder %v206, 0.0
    %vm2522 = vcmp.gt.f32.partialorder %v207, 0.0
    %vm2523 = vcmp.gt.f32.partialorder %v208, 0.0
    %vm2524 = vcmp.gt.f32.partialorder %v209, 0.0
    %v2525 = vsel %vm2461, 1, 0
    %v2526 = vsel %vm2462, 1, 0
    %v2527 = vsel %vm2463, 1, 0
    %v2528 = vsel %vm2464, 1, 0
    %v2529 = vsel %vm2465, 1, 0
    %v2530 = vsel %vm2466, 1, 0
    %v2531 = vsel %vm2467, 1, 0
    %v2532 = vsel %vm2468, 1, 0
    %v2533 = vsel %vm2469, 1, 0
    %v2534 = vsel %vm2470, 1, 0
    %v2535 = vsel %vm2471, 1, 0
    %v2536 = vsel %vm2472, 1, 0
    %v2537 = vsel %vm2473, 1, 0
    %v2538 = vsel %vm2474, 1, 0
    %v2539 = vsel %vm2475, 1, 0
    %v2540 = vsel %vm2476, 1, 0
    %v2541 = vsel %vm2477, 1, 0
    %v2542 = vsel %vm2478, 1, 0
    %v2543 = vsel %vm2479, 1, 0
    %v2544 = vsel %vm2480, 1, 0
    %v2545 = vsel %vm2481, 1, 0
    %v2546 = vsel %vm2482, 1, 0
    %v2547 = vsel %vm2483, 1, 0
    %v2548 = vsel %vm2484, 1, 0
    %v2549 = vsel %vm2485, 1, 0
    %v2550 = vsel %vm2486, 1, 0
    %v2551 = vsel %vm2487, 1, 0
    %v2552 = vsel %vm2488, 1, 0
    %v2553 = vsel %vm2489, 1, 0
    %v2554 = vsel %vm2490, 1, 0
    %v2555 = vsel %vm2491, 1, 0
    %v2556 = vsel %vm2492, 1, 0
    %v2557 = vsel %vm2493, 1, 0
    %v2558 = vsel %vm2494, 1, 0
    %v2559 = vsel %vm2495, 1, 0
    %v2560 = vsel %vm2496, 1, 0
    %v2561 = vsel %vm2497, 1, 0
    %v2562 = vsel %vm2498, 1, 0
    %v2563 = vsel %vm2499, 1, 0
    %v2564 = vsel %vm2500, 1, 0
    %v2565 = vsel %vm2501, 1, 0
    %v2566 = vsel %vm2502, 1, 0
    %v2567 = vsel %vm2503, 1, 0
    %v2568 = vsel %vm2504, 1, 0
    %v2569 = vsel %vm2505, 1, 0
    %v2570 = vsel %vm2506, 1, 0
    %v2571 = vsel %vm2507, 1, 0
    %v2572 = vsel %vm2508, 1, 0
    %v2573 = vsel %vm2509, 1, 0
    %v2574 = vsel %vm2510, 1, 0
    %v2575 = vsel %vm2511, 1, 0
    %v2576 = vsel %vm2512, 1, 0
    %v2577 = vsel %vm2513, 1, 0
    %v2578 = vsel %vm2514, 1, 0
    %v2579 = vsel %vm2515, 1, 0
    %v2580 = vsel %vm2516, 1, 0
    %v2581 = vsel %vm2517, 1, 0
    %v2582 = vsel %vm2518, 1, 0
    %v2583 = vsel %vm2519, 1, 0
    %v2584 = vsel %vm2520, 1, 0
    %v2585 = vsel %vm2521, 1, 0
    %v2586 = vsel %vm2522, 1, 0
    %v2587 = vsel %vm2523, 1, 0
    %v2588 = vsel %vm2524, 1, 0
    %v2589 = vcvt.s32.f32 %v2525
    %v2590 = vcvt.s32.f32 %v2526
    %v2591 = vcvt.s32.f32 %v2527
    %v2592 = vcvt.s32.f32 %v2528
    %v2593 = vcvt.s32.f32 %v2529
    %v2594 = vcvt.s32.f32 %v2530
    %v2595 = vcvt.s32.f32 %v2531
    %v2596 = vcvt.s32.f32 %v2532
    %v2597 = vcvt.s32.f32 %v2533
    %v2598 = vcvt.s32.f32 %v2534
    %v2599 = vcvt.s32.f32 %v2535
    %v2600 = vcvt.s32.f32 %v2536
    %v2601 = vcvt.s32.f32 %v2537
    %v2602 = vcvt.s32.f32 %v2538
    %v2603 = vcvt.s32.f32 %v2539
    %v2604 = vcvt.s32.f32 %v2540
    %v2605 = vcvt.s32.f32 %v2541
    %v2606 = vcvt.s32.f32 %v2542
    %v2607 = vcvt.s32.f32 %v2543
    %v2608 = vcvt.s32.f32 %v2544
    %v2609 = vcvt.s32.f32 %v2545
    %v2610 = vcvt.s32.f32 %v2546
    %v2611 = vcvt.s32.f32 %v2547
    %v2612 = vcvt.s32.f32 %v2548
    %v2613 = vcvt.s32.f32 %v2549
    %v2614 = vcvt.s32.f32 %v2550
    %v2615 = vcvt.s32.f32 %v2551
    %v2616 = vcvt.s32.f32 %v2552
    %v2617 = vcvt.s32.f32 %v2553
    %v2618 = vcvt.s32.f32 %v2554
    %v2619 = vcvt.s32.f32 %v2555
    %v2620 = vcvt.s32.f32 %v2556
    %v2621 = vcvt.s32.f32 %v2557
    %v2622 = vcvt.s32.f32 %v2558
    %v2623 = vcvt.s32.f32 %v2559
    %v2624 = vcvt.s32.f32 %v2560
    %v2625 = vcvt.s32.f32 %v2561
    %v2626 = vcvt.s32.f32 %v2562
    %v2627 = vcvt.s32.f32 %v2563
    %v2628 = vcvt.s32.f32 %v2564
    %v2629 = vcvt.s32.f32 %v2565
    %v2630 = vcvt.s32.f32 %v2566
    %v2631 = vcvt.s32.f32 %v2567
    %v2632 = vcvt.s32.f32 %v2568
    %v2633 = vcvt.s32.f32 %v2569
    %v2634 = vcvt.s32.f32 %v2570
    %v2635 = vcvt.s32.f32 %v2571
    %v2636 = vcvt.s32.f32 %v2572
    %v2637 = vcvt.s32.f32 %v2573
    %v2638 = vcvt.s32.f32 %v2574
    %v2639 = vcvt.s32.f32 %v2575
    %v2640 = vcvt.s32.f32 %v2576
    %v2641 = vcvt.s32.f32 %v2577
    %v2642 = vcvt.s32.f32 %v2578
    %v2643 = vcvt.s32.f32 %v2579
    %v2644 = vcvt.s32.f32 %v2580
    %v2645 = vcvt.s32.f32 %v2581
    %v2646 = vcvt.s32.f32 %v2582
    %v2647 = vcvt.s32.f32 %v2583
    %v2648 = vcvt.s32.f32 %v2584
    %v2649 = vcvt.s32.f32 %v2585
    %v2650 = vcvt.s32.f32 %v2586
    %v2651 = vcvt.s32.f32 %v2587
    %v2652 = vcvt.s32.f32 %v2588
    %v2653 = vsel %vm2322, %v2589, 0.0
    %v2654 = vsel %vm2322, %v2590, 0.0
    %v2655 = vadd.f32 %v2653, %v2654
    %v2656 = vsel %vm2322, %v2591, 0.0
    %v2657 = vadd.f32 %v2655, %v2656
    %v2658 = vsel %vm2322, %v2592, 0.0
    %v2659 = vadd.f32 %v2657, %v2658
    %v2660 = vsel %vm2322, %v2593, 0.0
    %v2661 = vadd.f32 %v2659, %v2660
    %v2662 = vsel %vm2322, %v2594, 0.0
    %v2663 = vadd.f32 %v2661, %v2662
    %v2664 = vsel %vm2322, %v2595, 0.0
    %v2665 = vadd.f32 %v2663, %v2664
    %v2666 = vsel %vm2322, %v2596, 0.0
    %v2667 = vadd.f32 %v2665, %v2666
    %v2668 = vsel %vm2322, %v2597, 0.0
    %v2669 = vadd.f32 %v2667, %v2668
    %v2670 = vsel %vm2322, %v2598, 0.0
    %v2671 = vadd.f32 %v2669, %v2670
    %v2672 = vsel %vm2322, %v2599, 0.0
    %v2673 = vadd.f32 %v2671, %v2672
    %v2674 = vsel %vm2322, %v2600, 0.0
    %v2675 = vadd.f32 %v2673, %v2674
    %v2676 = vsel %vm2322, %v2601, 0.0
    %v2677 = vadd.f32 %v2675, %v2676
    %v2678 = vsel %vm2322, %v2602, 0.0
    %v2679 = vadd.f32 %v2677, %v2678
    %v2680 = vsel %vm2322, %v2603, 0.0
    %v2681 = vadd.f32 %v2679, %v2680
    %v2682 = vsel %vm2322, %v2604, 0.0
    %v2683 = vadd.f32 %v2681, %v2682
    %v2684 = vsel %vm2322, %v2605, 0.0
    %v2685 = vadd.f32 %v2683, %v2684
    %v2686 = vsel %vm2322, %v2606, 0.0
    %v2687 = vadd.f32 %v2685, %v2686
    %v2688 = vsel %vm2322, %v2607, 0.0
    %v2689 = vadd.f32 %v2687, %v2688
    %v2690 = vsel %vm2322, %v2608, 0.0
    %v2691 = vadd.f32 %v2689, %v2690
    %v2692 = vsel %vm2322, %v2609, 0.0
    %v2693 = vadd.f32 %v2691, %v2692
    %v2694 = vsel %vm2322, %v2610, 0.0
    %v2695 = vadd.f32 %v2693, %v2694
    %v2696 = vsel %vm2322, %v2611, 0.0
    %v2697 = vadd.f32 %v2695, %v2696
    %v2698 = vsel %vm2322, %v2612, 0.0
    %v2699 = vadd.f32 %v2697, %v2698
    %v2700 = vsel %vm2322, %v2613, 0.0
    %v2701 = vadd.f32 %v2699, %v2700
    %v2702 = vsel %vm2322, %v2614, 0.0
    %v2703 = vadd.f32 %v2701, %v2702
    %v2704 = vsel %vm2322, %v2615, 0.0
    %v2705 = vadd.f32 %v2703, %v2704
    %v2706 = vsel %vm2322, %v2616, 0.0
    %v2707 = vadd.f32 %v2705, %v2706
    %v2708 = vsel %vm2322, %v2617, 0.0
    %v2709 = vadd.f32 %v2707, %v2708
    %v2710 = vsel %vm2322, %v2618, 0.0
    %v2711 = vadd.f32 %v2709, %v2710
    %v2712 = vsel %vm2322, %v2619, 0.0
    %v2713 = vadd.f32 %v2711, %v2712
    %v2714 = vsel %vm2322, %v2620, 0.0
    %v2715 = vadd.f32 %v2713, %v2714
    %v2716 = vsel %vm2322, %v2621, 0.0
    %v2717 = vadd.f32 %v2715, %v2716
    %v2718 = vsel %vm2322, %v2622, 0.0
    %v2719 = vadd.f32 %v2717, %v2718
    %v2720 = vsel %vm2322, %v2623, 0.0
    %v2721 = vadd.f32 %v2719, %v2720
    %v2722 = vsel %vm2322, %v2624, 0.0
    %v2723 = vadd.f32 %v2721, %v2722
    %v2724 = vsel %vm2322, %v2625, 0.0
    %v2725 = vadd.f32 %v2723, %v2724
    %v2726 = vsel %vm2322, %v2626, 0.0
    %v2727 = vadd.f32 %v2725, %v2726
    %v2728 = vsel %vm2322, %v2627, 0.0
    %v2729 = vadd.f32 %v2727, %v2728
    %v2730 = vsel %vm2322, %v2628, 0.0
    %v2731 = vadd.f32 %v2729, %v2730
    %v2732 = vsel %vm2322, %v2629, 0.0
    %v2733 = vadd.f32 %v2731, %v2732
    %v2734 = vsel %vm2322, %v2630, 0.0
    %v2735 = vadd.f32 %v2733, %v2734
    %v2736 = vsel %vm2322, %v2631, 0.0
    %v2737 = vadd.f32 %v2735, %v2736
    %v2738 = vsel %vm2322, %v2632, 0.0
    %v2739 = vadd.f32 %v2737, %v2738
    %v2740 = vsel %vm2322, %v2633, 0.0
    %v2741 = vadd.f32 %v2739, %v2740
    %v2742 = vsel %vm2322, %v2634, 0.0
    %v2743 = vadd.f32 %v2741, %v2742
    %v2744 = vsel %vm2322, %v2635, 0.0
    %v2745 = vadd.f32 %v2743, %v2744
    %v2746 = vsel %vm2322, %v2636, 0.0
    %v2747 = vadd.f32 %v2745, %v2746
    %v2748 = vsel %vm2322, %v2637, 0.0
    %v2749 = vadd.f32 %v2747, %v2748
    %v2750 = vsel %vm2322, %v2638, 0.0
    %v2751 = vadd.f32 %v2749, %v2750
    %v2752 = vsel %vm2322, %v2639, 0.0
    %v2753 = vadd.f32 %v2751, %v2752
    %v2754 = vsel %vm2322, %v2640, 0.0
    %v2755 = vadd.f32 %v2753, %v2754
    %v2756 = vsel %vm2322, %v2641, 0.0
    %v2757 = vadd.f32 %v2755, %v2756
    %v2758 = vsel %vm2322, %v2642, 0.0
    %v2759 = vadd.f32 %v2757, %v2758
    %v2760 = vsel %vm2322, %v2643, 0.0
    %v2761 = vadd.f32 %v2759, %v2760
    %v2762 = vsel %vm2322, %v2644, 0.0
    %v2763 = vadd.f32 %v2761, %v2762
    %v2764 = vsel %vm2322, %v2645, 0.0
    %v2765 = vadd.f32 %v2763, %v2764
    %v2766 = vsel %vm2322, %v2646, 0.0
    %v2767 = vadd.f32 %v2765, %v2766
    %v2768 = vsel %vm2322, %v2647, 0.0
    %v2769 = vadd.f32 %v2767, %v2768
    %v2770 = vsel %vm2322, %v2648, 0.0
    %v2771 = vadd.f32 %v2769, %v2770
    %v2772 = vsel %vm2322, %v2649, 0.0
    %v2773 = vadd.f32 %v2771, %v2772
    %v2774 = vsel %vm2322, %v2650, 0.0
    %v2775 = vadd.f32 %v2773, %v2774
    %v2776 = vsel %vm2322, %v2651, 0.0
    %v2777 = vadd.f32 %v2775, %v2776
    %v2778 = vsel %vm2322, %v2652, 0.0
    %v2779 = vadd.f32 %v2777, %v2778
    %2780 = vadd.xlane.f32.xlu0 %v2779
    %v2781 = vpop.xlane.xlu0 %2780
    %v2782 = vrot.slane %v2781, 4
    %v2783 = vadd.f32 %v2781, %v2782
    %v2784 = vrot.slane %v2783, 2
    %v2785 = vadd.f32 %v2783, %v2784
    %v2786 = vrot.slane %v2785, 1
    %v2787 = vadd.f32 %v2785, %v2786
    %s2788 = vtos %v2787
    %s2789 = scalar_lea.smem [#allocation4], 0
    %2790 = sst [smem:[%s2789]] %s2788
    // Predicated region
    $region14: #{tpu_custom_call.1} parent=1 // pred_check
      _
    $region15: #{tpu_custom_call.1} parent=1 // pred_check_branch
      %2792 = sbr.rel (0) target = $region17
    $region16: #{tpu_custom_call.1} parent=1 // pred_region
      %s2794 = ssub.s32 16, 16
      %2795 = vsyncadd [#allocation3], %s2794
      %2798 = dma.smem_to_hbm [#allocation2], 16, %s3, [#allocation3]
    $region17: #{tpu_custom_call.1} parent=1 // pred_fallthru
      _
    // Predicated region
    $region18: #{tpu_custom_call.1} parent=1 // pred_check
      _
    $region19: #{tpu_custom_call.1} parent=1 // pred_check_branch
      %2800 = sbr.rel (0) target = $region21
    $region20: #{tpu_custom_call.1} parent=1 // pred_region
      %s2802 = ssub.s32 16, 16
      %2803 = vsyncadd [#allocation5], %s2802
      %2806 = dma.smem_to_hbm [#allocation4], 16, %s4, [#allocation5]
    $region21: #{tpu_custom_call.1} parent=1 // pred_fallthru
      _
    // Predicated region
    $region22: #{tpu_custom_call.1} parent=1 // pred_check
      _
    $region23: #{tpu_custom_call.1} parent=1 // pred_check_branch
      %2808 = sbr.rel (0) target = $region25
    $region24: #{tpu_custom_call.1} parent=1 // pred_region
      %2809 = dma.done [#allocation3], 16
    $region25: #{tpu_custom_call.1} parent=1 // pred_fallthru
      _
    // Predicated region
    $region26: #{tpu_custom_call.1} parent=1 // pred_check
      _
    $region27: #{tpu_custom_call.1} parent=1 // pred_check_branch
      %2811 = sbr.rel (0) target = $region29
    $region28: #{tpu_custom_call.1} parent=1 // pred_region
      %2812 = dma.done [#allocation5], 16
    $region29: #{tpu_custom_call.1} parent=1 // pred_fallthru
      _
    %2813 = sfence
    %2814 = vsyncpa [#allocation3], 1
    %2815 = vsyncpa [#allocation5], 1

</llo_original>
